<compile_context>
chip_gen: v7x
topology: tpu7x:2x2x1
jax: 0.10.0
libtpu: 0.0.40
codegen_flags: <defaults>
</compile_context>

<pallas_src>
import math
import jax
import jax.numpy as jnp
from jax.experimental import pallas as pl
from jax.experimental.pallas import tpu as pltpu


def make_self_attention_kernel(lq, lk, lv, embedding_size, heads, compute_dtype):
    head_dim = embedding_size // heads
    assert head_dim * heads == embedding_size, "Check the embedding size and heads"
    assert lk == lv, "attention @ values requires len_keys == len_values"
    scale = 1.0 / math.sqrt(head_dim)
    e = embedding_size

    def kernel(q_ref, k_ref, v_ref, mask_ref, w_ref, o_ref):
        nb = q_ref.shape[0]

        # ---- static views into the single weight slab (5E, E) ----
        wq_bd = w_ref[0 * e:1 * e, :]            # kron(I_H, Wq.T)
        wk_bd = w_ref[1 * e:2 * e, :]            # kron(I_H, Wk.T)
        wv_bd = w_ref[2 * e:3 * e, :]            # kron(I_H, Wv.T)
        wo_t = w_ref[3 * e:4 * e, :]             # Wo.T
        bo_row = w_ref[4 * e:4 * e + 1, :].astype(jnp.float32)   # (1, E)

        # ---- full-width projections: (nb*L, E) @ (E, E) on the MXU ----
        q2 = q_ref[...].reshape(nb * lq, e)
        k2 = k_ref[...].reshape(nb * lk, e)
        v2 = v_ref[...].reshape(nb * lv, e)

        qp = jnp.dot(q2, wq_bd, preferred_element_type=jnp.float32)
        kp = jnp.dot(k2, wk_bd, preferred_element_type=jnp.float32)
        vp = jnp.dot(v2, wv_bd, preferred_element_type=jnp.float32)

        qp3 = qp.astype(compute_dtype).reshape(nb, lq, e)
        kp3 = kp.astype(compute_dtype).reshape(nb, lk, e)
        vp3 = vp.astype(compute_dtype).reshape(nb, lv, e)

        # ---- fold heads into the batch axis: (heads*nb, L, d) ----
        def split_heads(x3, length):
            parts = [x3[:, :, h * head_dim:(h + 1) * head_dim] for h in range(heads)]
            return jnp.stack(parts, axis=0).reshape(heads * nb, length, head_dim)

        qh = split_heads(qp3, lq)
        kh = split_heads(kp3, lk)
        vh = split_heads(vp3, lv)

        # energy = einsum('nqhd,nkhd->nhqk'), batched over (heads*nb)
        energy = jnp.einsum('bqd,bkd->bqk', qh, kh,
                            preferred_element_type=jnp.float32)   # (H*nb, lq, lk)

        # masked_fill(mask == 0, -1e19) BEFORE the 1/sqrt(d) scaling (as in PyTorch).
        # Keep this path f32: -1e19 overflows bf16 and would NaN fully-masked rows.
        mask = mask_ref[...]                                       # (nb, lq, lk) int32
        mask_full = jnp.broadcast_to(
            mask[None], (heads, nb, lq, lk)).reshape(heads * nb, lq, lk)
        energy = jnp.where(mask_full == 0, jnp.float32(-1e19), energy)
        scaled = energy * scale

        # ---- ONE fused softmax over all heads & batch rows (f32) ----
        m = jnp.max(scaled, axis=-1, keepdims=True)
        ex = jnp.exp(scaled - m)
        denom = jnp.sum(ex, axis=-1, keepdims=True)
        inv = pl.reciprocal(denom, approx=True)
        inv = inv * (2.0 - denom * inv)          # one Newton step -> ~f32 exact
        attn = (ex * inv).astype(compute_dtype)

        # context = attention @ values, still batched over (heads*nb)
        ctx = jnp.einsum('bqk,bkd->bqd', attn, vh,
                         preferred_element_type=jnp.float32)       # (H*nb, lq, d)

        # ---- single fc_out matmul: gather heads back onto the lane axis ----
        ctx4 = ctx.astype(compute_dtype).reshape(heads, nb, lq, head_dim)
        ctx_all = jnp.concatenate(
            [ctx4[h].reshape(nb * lq, head_dim) for h in range(heads)],
            axis=-1)                                               # (nb*lq, E)

        out2 = jnp.dot(ctx_all, wo_t,
                       preferred_element_type=jnp.float32) + bo_row   # (nb*lq, E)

        # ---- lane-dense store: relayout (nb, lq, E) -> (nb, 1, lq*E) ----
        # Static sublane slices + one lane concatenate (XLU slot, idle here).
        out3 = out2.reshape(nb, lq, e)
        out_flat = jnp.concatenate(
            [out3[:, q:q + 1, :] for q in range(lq)], axis=-1)     # (nb, 1, lq*e)
        o_ref[...] = out_flat.astype(o_ref.dtype)

    return kernel


def _pick_block_n(n, lq, lk, lv, e, in_bytes, out_bytes, vmem_budget_bytes):
    """Largest divisor of n whose double-buffered working set fits the budget.

    One grid step (block_n == n) amortizes the ~600-cycle per-step pipeline
    overhead best on single-TC chips (v5e/v6e).  On v7x, pass block_n ~= n/2
    explicitly once per-step work clearly exceeds that overhead, so both
    TensorCores get one large step each.
    """
    def vmem_est(bn):
        per_step_in = bn * (lq + lk + lv) * e * in_bytes + bn * lq * lk * 4
        weights = 5 * e * e * in_bytes
        per_step_out = bn * lq * e * out_bytes
        return 2 * (per_step_in + weights + per_step_out)   # double-buffered

    for bn in sorted((d for d in range(1, n + 1) if n % d == 0), reverse=True):
        if vmem_est(bn) <= vmem_budget_bytes:
            return bn
    return 1


def self_attention_pallas(values, keys, queries, mask, wv, wk, wq, wo, bo,
                          embedding_size, heads, *,
                          compute_dtype=jnp.float32,   # keep f32 on v5e
                          block_n=None,
                          vmem_budget_bytes=12 * 1024 * 1024):
    n, lq, _ = queries.shape
    lk = keys.shape[1]
    lv = values.shape[1]
    e = embedding_size
    head_dim = e // heads
    assert head_dim * heads == e, "Check the embedding size and heads"
    assert lk == lv

    in_bytes = jnp.dtype(compute_dtype).itemsize
    out_bytes = jnp.dtype(queries.dtype).itemsize
    if block_n is None:
        block_n = _pick_block_n(n, lq, lk, lv, e, in_bytes, out_bytes,
                                vmem_budget_bytes)
    assert n % block_n == 0

    # ---- host-side prep (free, done once under jit) ----
    # One weight slab: [kron(I,Wq.T); kron(I,Wk.T); kron(I,Wv.T); Wo.T; bo-pad]
    eye = jnp.eye(heads, dtype=jnp.float32)
    wq_bd = jnp.kron(eye, wq.T)
    wk_bd = jnp.kron(eye, wk.T)
    wv_bd = jnp.kron(eye, wv.T)
    wo_t = wo.T
    bo_pad = jnp.zeros((e, e), jnp.float32).at[0, :].set(bo)
    w_slab = jnp.concatenate([wq_bd, wk_bd, wv_bd, wo_t, bo_pad],
                             axis=0).astype(compute_dtype)          # (5E, E)

    # Compact int32 mask (fill built in-kernel).  Broadcast head dim must be 1.
    # TODO(synk): could ship as int8 for another 4x less mask HBM traffic on v5e.
    if mask is None:
        mask3 = jnp.ones((n, lq, lk), jnp.int32)
    else:
        assert mask.ndim != 4 or mask.shape[1] == 1, "per-head masks not supported"
        mask3 = mask.astype(jnp.int32).reshape(n, -1, lq, lk)[:, 0]  # (N, Lq, Lk)

    q_in = queries.astype(compute_dtype)
    k_in = keys.astype(compute_dtype)
    v_in = values.astype(compute_dtype)

    kernel = make_self_attention_kernel(lq, lk, lv, e, heads, compute_dtype)

    out_flat = pl.pallas_call(
        kernel,
        out_shape=jax.ShapeDtypeStruct((n, 1, lq * e), queries.dtype),
        grid_spec=pltpu.PrefetchScalarGridSpec(
            num_scalar_prefetch=0,
            grid=(n // block_n,),
            in_specs=[
                pl.BlockSpec((block_n, lq, e), lambda b: (b, 0, 0)),    # queries
                pl.BlockSpec((block_n, lk, e), lambda b: (b, 0, 0)),    # keys
                pl.BlockSpec((block_n, lv, e), lambda b: (b, 0, 0)),    # values
                pl.BlockSpec((block_n, lq, lk), lambda b: (b, 0, 0)),   # mask (int32)
                pl.BlockSpec((5 * e, e), lambda b: (0, 0)),             # weight slab
            ],
            out_specs=pl.BlockSpec((block_n, 1, lq * e), lambda b: (b, 0, 0)),
        ),
        compiler_params=pltpu.CompilerParams(
            dimension_semantics=("parallel",)),
    )(q_in, k_in, v_in, mask3, w_slab)

    # lane-dense (N, 1, Lq*E) slab back to the module's (N, Lq, E) layout.
    return out_flat.reshape(n, lq, e)


def self_attention_ref(values, keys, queries, mask, wv, wk, wq, wo, bo,
                       embedding_size, heads):
    """Pure-JAX reference mirroring the PyTorch forward exactly."""
    n = queries.shape[0]
    lv, lk, lq = values.shape[1], keys.shape[1], queries.shape[1]
    d = embedding_size // heads
    v = values.reshape(n, lv, heads, d) @ wv.T
    k = keys.reshape(n, lk, heads, d) @ wk.T
    q = queries.reshape(n, lq, heads, d) @ wq.T
    energy = jnp.einsum('nqhd,nkhd->nhqk', q, k)
    energy = jnp.where(mask == 0, jnp.float32(-1e19), energy)
    attn = jax.nn.softmax(energy / (d ** 0.5), axis=3)
    out = jnp.einsum('nhql,nlhd->nqhd', attn, v)
    out = out.reshape(n, lq, heads * d)
    return out @ wo.T + bo


if __name__ == "__main__":
    # Small, module-consistent shapes.
    N, L, E, H = 2, 8, 32, 4          # batch, seq, embedding_size, heads
    D = E // H

    key = jax.random.PRNGKey(0)
    kq, kk, kv, km, kwq, kwk, kwv, kwo, kbo = jax.random.split(key, 9)

    queries = jax.random.normal(kq, (N, L, E), dtype=jnp.float32)
    keys_in = jax.random.normal(kk, (N, L, E), dtype=jnp.float32)
    values = jax.random.normal(kv, (N, L, E), dtype=jnp.float32)
    # mask broadcast over heads; 0 = masked out.
    mask = (jax.random.uniform(km, (N, 1, L, L)) > 0.2).astype(jnp.int32)

    # Deterministic parameter init (nn.Linear weight shape = (out, in)).
    wq = jax.random.normal(kwq, (D, D), dtype=jnp.float32) * (1.0 / math.sqrt(D))
    wk = jax.random.normal(kwk, (D, D), dtype=jnp.float32) * (1.0 / math.sqrt(D))
    wv = jax.random.normal(kwv, (D, D), dtype=jnp.float32) * (1.0 / math.sqrt(D))
    wo = jax.random.normal(kwo, (E, E), dtype=jnp.float32) * (1.0 / math.sqrt(E))
    bo = jax.random.normal(kbo, (E,), dtype=jnp.float32) * 0.01

    ref = self_attention_ref(values, keys_in, queries, mask,
                             wv, wk, wq, wo, bo, E, H)

    # f32 path (default; v5e-safe): tight correctness check.
    out_f32 = self_attention_pallas(values, keys_in, queries, mask,
                                    wv, wk, wq, wo, bo, E, H,
                                    compute_dtype=jnp.float32)
    out_f32 = jax.block_until_ready(out_f32)
    assert out_f32.shape == (N, L, E)
    assert jnp.allclose(out_f32, ref, atol=2e-4, rtol=2e-4), "f32 mismatch vs reference"

    # bf16 MXU operands (v6e/v7x-oriented); mask/softmax arithmetic stays f32.
    out_bf16 = self_attention_pallas(values, keys_in, queries, mask,
                                     wv, wk, wq, wo, bo, E, H,
                                     compute_dtype=jnp.bfloat16)
    out_bf16 = jax.block_until_ready(out_bf16)
    assert out_bf16.shape == (N, L, E)
    assert jnp.allclose(out_bf16, ref, atol=1.5e-1, rtol=1e-1), "bf16 mismatch vs reference"

    print("KERNEL_OK")
</pallas_src>

<mosaic_0001>
module attributes {stable_mosaic.version = 11 : i64} {
  func.func @kernel(%arg0: i32, %arg1: memref<2x8x32xf32, #tpu.memory_space<vmem>>, %arg2: memref<2x8x32xf32, #tpu.memory_space<vmem>>, %arg3: memref<2x8x32xf32, #tpu.memory_space<vmem>>, %arg4: memref<2x8x8xi32, #tpu.memory_space<vmem>>, %arg5: memref<160x32xf32, #tpu.memory_space<vmem>>, %arg6: memref<2x1x256xf32, #tpu.memory_space<vmem>>) attributes {dimension_semantics = [#tpu.dimension_semantics<parallel>], iteration_bounds = array<i64: 1>, scalar_prefetch = 0 : i64, scratch_operands = 0 : i64, tpu.core_type = #tpu.core_type<tc>, window_params = [{transform_indices = @transform_0, window_bounds = array<i64: 2, 8, 32>}, {transform_indices = @transform_1, window_bounds = array<i64: 2, 8, 32>}, {transform_indices = @transform_2, window_bounds = array<i64: 2, 8, 32>}, {transform_indices = @transform_3, window_bounds = array<i64: 2, 8, 8>}, {pipeline_mode = #tpu.pipeline_mode<synchronous>, transform_indices = @transform_4, window_bounds = array<i64: 160, 32>}, {transform_indices = @transform_5, window_bounds = array<i64: 2, 1, 256>}]} {
    %c0 = arith.constant 0 : index
    %c0_0 = arith.constant 0 : index
    %0 = vector.load %arg5[%c0, %c0_0] : memref<160x32xf32, #tpu.memory_space<vmem>>, vector<32x32xf32>
    %c32 = arith.constant 32 : index
    %c0_1 = arith.constant 0 : index
    %1 = vector.load %arg5[%c32, %c0_1] : memref<160x32xf32, #tpu.memory_space<vmem>>, vector<32x32xf32>
    %c64 = arith.constant 64 : index
    %c0_2 = arith.constant 0 : index
    %2 = vector.load %arg5[%c64, %c0_2] : memref<160x32xf32, #tpu.memory_space<vmem>>, vector<32x32xf32>
    %c96 = arith.constant 96 : index
    %c0_3 = arith.constant 0 : index
    %3 = vector.load %arg5[%c96, %c0_3] : memref<160x32xf32, #tpu.memory_space<vmem>>, vector<32x32xf32>
    %c128 = arith.constant 128 : index
    %c0_4 = arith.constant 0 : index
    %4 = vector.load %arg5[%c128, %c0_4] : memref<160x32xf32, #tpu.memory_space<vmem>>, vector<1x32xf32>
    %c0_5 = arith.constant 0 : index
    %c0_6 = arith.constant 0 : index
    %c0_7 = arith.constant 0 : index
    %5 = vector.load %arg1[%c0_5, %c0_6, %c0_7] : memref<2x8x32xf32, #tpu.memory_space<vmem>>, vector<2x8x32xf32>
    %6 = vector.shape_cast %5 : vector<2x8x32xf32> to vector<16x32xf32>
    %c0_8 = arith.constant 0 : index
    %c0_9 = arith.constant 0 : index
    %c0_10 = arith.constant 0 : index
    %7 = vector.load %arg2[%c0_8, %c0_9, %c0_10] : memref<2x8x32xf32, #tpu.memory_space<vmem>>, vector<2x8x32xf32>
    %8 = vector.shape_cast %7 : vector<2x8x32xf32> to vector<16x32xf32>
    %c0_11 = arith.constant 0 : index
    %c0_12 = arith.constant 0 : index
    %c0_13 = arith.constant 0 : index
    %9 = vector.load %arg3[%c0_11, %c0_12, %c0_13] : memref<2x8x32xf32, #tpu.memory_space<vmem>>, vector<2x8x32xf32>
    %10 = vector.shape_cast %9 : vector<2x8x32xf32> to vector<16x32xf32>
    %cst = arith.constant dense<0.000000e+00> : vector<16x32xf32>
    %11 = tpu.matmul %6, %0, %cst {dimension_numbers = #tpu.dot_dimension_numbers<[1], [0], [0], [1], [0, 0, 1, 1], [], []>} : vector<16x32xf32>, vector<32x32xf32>, vector<16x32xf32> -> vector<16x32xf32>
    %cst_14 = arith.constant dense<0.000000e+00> : vector<16x32xf32>
    %12 = tpu.matmul %8, %1, %cst_14 {dimension_numbers = #tpu.dot_dimension_numbers<[1], [0], [0], [1], [0, 0, 1, 1], [], []>} : vector<16x32xf32>, vector<32x32xf32>, vector<16x32xf32> -> vector<16x32xf32>
    %cst_15 = arith.constant dense<0.000000e+00> : vector<16x32xf32>
    %13 = tpu.matmul %10, %2, %cst_15 {dimension_numbers = #tpu.dot_dimension_numbers<[1], [0], [0], [1], [0, 0, 1, 1], [], []>} : vector<16x32xf32>, vector<32x32xf32>, vector<16x32xf32> -> vector<16x32xf32>
    %14 = vector.shape_cast %11 : vector<16x32xf32> to vector<2x8x32xf32>
    %15 = vector.shape_cast %12 : vector<16x32xf32> to vector<2x8x32xf32>
    %16 = vector.shape_cast %13 : vector<16x32xf32> to vector<2x8x32xf32>
    %17 = vector.extract_strided_slice %14 {offsets = [0, 0, 0], sizes = [2, 8, 8], strides = [1, 1, 1]} : vector<2x8x32xf32> to vector<2x8x8xf32>
    %18 = vector.extract_strided_slice %14 {offsets = [0, 0, 8], sizes = [2, 8, 8], strides = [1, 1, 1]} : vector<2x8x32xf32> to vector<2x8x8xf32>
    %19 = vector.extract_strided_slice %14 {offsets = [0, 0, 16], sizes = [2, 8, 8], strides = [1, 1, 1]} : vector<2x8x32xf32> to vector<2x8x8xf32>
    %20 = vector.extract_strided_slice %14 {offsets = [0, 0, 24], sizes = [2, 8, 8], strides = [1, 1, 1]} : vector<2x8x32xf32> to vector<2x8x8xf32>
    %21 = vector.shape_cast %17 : vector<2x8x8xf32> to vector<1x2x8x8xf32>
    %22 = vector.shape_cast %18 : vector<2x8x8xf32> to vector<1x2x8x8xf32>
    %23 = vector.shape_cast %19 : vector<2x8x8xf32> to vector<1x2x8x8xf32>
    %24 = vector.shape_cast %20 : vector<2x8x8xf32> to vector<1x2x8x8xf32>
    %25 = tpu.concatenate %21, %22, %23, %24 in 0 : vector<1x2x8x8xf32>, vector<1x2x8x8xf32>, vector<1x2x8x8xf32>, vector<1x2x8x8xf32> -> vector<4x2x8x8xf32>
    %26 = vector.shape_cast %25 : vector<4x2x8x8xf32> to vector<8x8x8xf32>
    %27 = vector.extract_strided_slice %15 {offsets = [0, 0, 0], sizes = [2, 8, 8], strides = [1, 1, 1]} : vector<2x8x32xf32> to vector<2x8x8xf32>
    %28 = vector.extract_strided_slice %15 {offsets = [0, 0, 8], sizes = [2, 8, 8], strides = [1, 1, 1]} : vector<2x8x32xf32> to vector<2x8x8xf32>
    %29 = vector.extract_strided_slice %15 {offsets = [0, 0, 16], sizes = [2, 8, 8], strides = [1, 1, 1]} : vector<2x8x32xf32> to vector<2x8x8xf32>
    %30 = vector.extract_strided_slice %15 {offsets = [0, 0, 24], sizes = [2, 8, 8], strides = [1, 1, 1]} : vector<2x8x32xf32> to vector<2x8x8xf32>
    %31 = vector.shape_cast %27 : vector<2x8x8xf32> to vector<1x2x8x8xf32>
    %32 = vector.shape_cast %28 : vector<2x8x8xf32> to vector<1x2x8x8xf32>
    %33 = vector.shape_cast %29 : vector<2x8x8xf32> to vector<1x2x8x8xf32>
    %34 = vector.shape_cast %30 : vector<2x8x8xf32> to vector<1x2x8x8xf32>
    %35 = tpu.concatenate %31, %32, %33, %34 in 0 : vector<1x2x8x8xf32>, vector<1x2x8x8xf32>, vector<1x2x8x8xf32>, vector<1x2x8x8xf32> -> vector<4x2x8x8xf32>
    %36 = vector.shape_cast %35 : vector<4x2x8x8xf32> to vector<8x8x8xf32>
    %37 = vector.extract_strided_slice %16 {offsets = [0, 0, 0], sizes = [2, 8, 8], strides = [1, 1, 1]} : vector<2x8x32xf32> to vector<2x8x8xf32>
    %38 = vector.extract_strided_slice %16 {offsets = [0, 0, 8], sizes = [2, 8, 8], strides = [1, 1, 1]} : vector<2x8x32xf32> to vector<2x8x8xf32>
    %39 = vector.extract_strided_slice %16 {offsets = [0, 0, 16], sizes = [2, 8, 8], strides = [1, 1, 1]} : vector<2x8x32xf32> to vector<2x8x8xf32>
    %40 = vector.extract_strided_slice %16 {offsets = [0, 0, 24], sizes = [2, 8, 8], strides = [1, 1, 1]} : vector<2x8x32xf32> to vector<2x8x8xf32>
    %41 = vector.shape_cast %37 : vector<2x8x8xf32> to vector<1x2x8x8xf32>
    %42 = vector.shape_cast %38 : vector<2x8x8xf32> to vector<1x2x8x8xf32>
    %43 = vector.shape_cast %39 : vector<2x8x8xf32> to vector<1x2x8x8xf32>
    %44 = vector.shape_cast %40 : vector<2x8x8xf32> to vector<1x2x8x8xf32>
    %45 = tpu.concatenate %41, %42, %43, %44 in 0 : vector<1x2x8x8xf32>, vector<1x2x8x8xf32>, vector<1x2x8x8xf32>, vector<1x2x8x8xf32> -> vector<4x2x8x8xf32>
    %46 = vector.shape_cast %45 : vector<4x2x8x8xf32> to vector<8x8x8xf32>
    "tpu.trace_start"() <{level = 10 : i32, message = "bqd,bkd->bqk"}> : () -> ()
    %cst_16 = arith.constant dense<0.000000e+00> : vector<8x8x8xf32>
    %47 = tpu.matmul %26, %36, %cst_16 {dimension_numbers = #tpu.dot_dimension_numbers<[2], [2], [1], [1], [0, 0, 0, 1, 1, 1], [0], [0]>} : vector<8x8x8xf32>, vector<8x8x8xf32>, vector<8x8x8xf32> -> vector<8x8x8xf32>
    "tpu.trace_stop"() : () -> ()
    %c0_17 = arith.constant 0 : index
    %c0_18 = arith.constant 0 : index
    %c0_19 = arith.constant 0 : index
    %48 = vector.load %arg4[%c0_17, %c0_18, %c0_19] : memref<2x8x8xi32, #tpu.memory_space<vmem>>, vector<2x8x8xi32>
    %49 = vector.shape_cast %48 : vector<2x8x8xi32> to vector<1x2x8x8xi32>
    %50 = vector.shape_cast %49 : vector<1x2x8x8xi32> to vector<1x2x8x8xi32>
    %51 = vector.broadcast %50 : vector<1x2x8x8xi32> to vector<4x2x8x8xi32>
    %52 = vector.shape_cast %51 : vector<4x2x8x8xi32> to vector<8x8x8xi32>
    %c0_i32 = arith.constant 0 : i32
    %53 = vector.broadcast %c0_i32 : i32 to vector<8x8x8xi32>
    %54 = arith.cmpi eq, %52, %53 : vector<8x8x8xi32>
    %cst_20 = arith.constant -9.99999998E+18 : f32
    %55 = vector.broadcast %cst_20 : f32 to vector<8x8x8xf32>
    %56 = arith.select %54, %55, %47 : vector<8x8x8xi1>, vector<8x8x8xf32>
    %cst_21 = arith.constant 0.353553385 : f32
    %57 = vector.broadcast %cst_21 : f32 to vector<8x8x8xf32>
    %58 = arith.mulf %56, %57 : vector<8x8x8xf32>
    %cst_22 = arith.constant dense<0xFF800000> : vector<8x8xf32>
    %59 = vector.multi_reduction <maximumf>, %58, %cst_22 [2] : vector<8x8x8xf32> to vector<8x8xf32>
    %60 = vector.shape_cast %59 : vector<8x8xf32> to vector<8x8x1xf32>
    %61 = vector.broadcast %60 : vector<8x8x1xf32> to vector<8x8x8xf32>
    %62 = arith.subf %58, %61 : vector<8x8x8xf32>
    %63 = math.exp %62 : vector<8x8x8xf32>
    %cst_23 = arith.constant dense<0.000000e+00> : vector<8x8xf32>
    %64 = vector.multi_reduction <add>, %63, %cst_23 [2] : vector<8x8x8xf32> to vector<8x8xf32>
    %65 = vector.shape_cast %64 : vector<8x8xf32> to vector<8x8x1xf32>
    %66 = tpu.reciprocal %65 {approx = true} : vector<8x8x1xf32> -> vector<8x8x1xf32>
    %67 = arith.mulf %65, %66 : vector<8x8x1xf32>
    %cst_24 = arith.constant 2.000000e+00 : f32
    %68 = vector.broadcast %cst_24 : f32 to vector<8x8x1xf32>
    %69 = arith.subf %68, %67 : vector<8x8x1xf32>
    %70 = arith.mulf %66, %69 : vector<8x8x1xf32>
    %71 = vector.broadcast %70 : vector<8x8x1xf32> to vector<8x8x8xf32>
    %72 = arith.mulf %63, %71 : vector<8x8x8xf32>
    "tpu.trace_start"() <{level = 10 : i32, message = "bqk,bkd->bqd"}> : () -> ()
    %cst_25 = arith.constant dense<0.000000e+00> : vector<8x8x8xf32>
    %73 = tpu.matmul %72, %46, %cst_25 {dimension_numbers = #tpu.dot_dimension_numbers<[2], [1], [1], [2], [0, 0, 0, 1, 1, 2], [0], [0]>} : vector<8x8x8xf32>, vector<8x8x8xf32>, vector<8x8x8xf32> -> vector<8x8x8xf32>
    "tpu.trace_stop"() : () -> ()
    %74 = vector.shape_cast %73 : vector<8x8x8xf32> to vector<4x2x8x8xf32>
    %75 = vector.extract_strided_slice %74 {offsets = [0, 0, 0, 0], sizes = [1, 2, 8, 8], strides = [1, 1, 1, 1]} : vector<4x2x8x8xf32> to vector<1x2x8x8xf32>
    %76 = vector.shape_cast %75 : vector<1x2x8x8xf32> to vector<2x8x8xf32>
    %77 = vector.shape_cast %76 : vector<2x8x8xf32> to vector<16x8xf32>
    %78 = vector.extract_strided_slice %74 {offsets = [1, 0, 0, 0], sizes = [1, 2, 8, 8], strides = [1, 1, 1, 1]} : vector<4x2x8x8xf32> to vector<1x2x8x8xf32>
    %79 = vector.shape_cast %78 : vector<1x2x8x8xf32> to vector<2x8x8xf32>
    %80 = vector.shape_cast %79 : vector<2x8x8xf32> to vector<16x8xf32>
    %81 = vector.extract_strided_slice %74 {offsets = [2, 0, 0, 0], sizes = [1, 2, 8, 8], strides = [1, 1, 1, 1]} : vector<4x2x8x8xf32> to vector<1x2x8x8xf32>
    %82 = vector.shape_cast %81 : vector<1x2x8x8xf32> to vector<2x8x8xf32>
    %83 = vector.shape_cast %82 : vector<2x8x8xf32> to vector<16x8xf32>
    %84 = vector.extract_strided_slice %74 {offsets = [3, 0, 0, 0], sizes = [1, 2, 8, 8], strides = [1, 1, 1, 1]} : vector<4x2x8x8xf32> to vector<1x2x8x8xf32>
    %85 = vector.shape_cast %84 : vector<1x2x8x8xf32> to vector<2x8x8xf32>
    %86 = vector.shape_cast %85 : vector<2x8x8xf32> to vector<16x8xf32>
    %87 = tpu.concatenate %77, %80, %83, %86 in 1 : vector<16x8xf32>, vector<16x8xf32>, vector<16x8xf32>, vector<16x8xf32> -> vector<16x32xf32>
    %cst_26 = arith.constant dense<0.000000e+00> : vector<16x32xf32>
    %88 = tpu.matmul %87, %3, %cst_26 {dimension_numbers = #tpu.dot_dimension_numbers<[1], [0], [0], [1], [0, 0, 1, 1], [], []>} : vector<16x32xf32>, vector<32x32xf32>, vector<16x32xf32> -> vector<16x32xf32>
    %89 = vector.broadcast %4 : vector<1x32xf32> to vector<16x32xf32>
    %90 = arith.addf %88, %89 : vector<16x32xf32>
    %91 = vector.shape_cast %90 : vector<16x32xf32> to vector<2x8x32xf32>
    %92 = vector.extract_strided_slice %91 {offsets = [0, 0, 0], sizes = [2, 1, 32], strides = [1, 1, 1]} : vector<2x8x32xf32> to vector<2x1x32xf32>
    %93 = vector.extract_strided_slice %91 {offsets = [0, 1, 0], sizes = [2, 1, 32], strides = [1, 1, 1]} : vector<2x8x32xf32> to vector<2x1x32xf32>
    %94 = vector.extract_strided_slice %91 {offsets = [0, 2, 0], sizes = [2, 1, 32], strides = [1, 1, 1]} : vector<2x8x32xf32> to vector<2x1x32xf32>
    %95 = vector.extract_strided_slice %91 {offsets = [0, 3, 0], sizes = [2, 1, 32], strides = [1, 1, 1]} : vector<2x8x32xf32> to vector<2x1x32xf32>
    %96 = vector.extract_strided_slice %91 {offsets = [0, 4, 0], sizes = [2, 1, 32], strides = [1, 1, 1]} : vector<2x8x32xf32> to vector<2x1x32xf32>
    %97 = vector.extract_strided_slice %91 {offsets = [0, 5, 0], sizes = [2, 1, 32], strides = [1, 1, 1]} : vector<2x8x32xf32> to vector<2x1x32xf32>
    %98 = vector.extract_strided_slice %91 {offsets = [0, 6, 0], sizes = [2, 1, 32], strides = [1, 1, 1]} : vector<2x8x32xf32> to vector<2x1x32xf32>
    %99 = vector.extract_strided_slice %91 {offsets = [0, 7, 0], sizes = [2, 1, 32], strides = [1, 1, 1]} : vector<2x8x32xf32> to vector<2x1x32xf32>
    %100 = tpu.concatenate %92, %93, %94, %95, %96, %97, %98, %99 in 2 : vector<2x1x32xf32>, vector<2x1x32xf32>, vector<2x1x32xf32>, vector<2x1x32xf32>, vector<2x1x32xf32>, vector<2x1x32xf32>, vector<2x1x32xf32>, vector<2x1x32xf32> -> vector<2x1x256xf32>
    %c0_27 = arith.constant 0 : index
    %c0_28 = arith.constant 0 : index
    %c0_29 = arith.constant 0 : index
    %101 = vector.load %arg6[%c0_27, %c0_28, %c0_29] : memref<2x1x256xf32, #tpu.memory_space<vmem>>, vector<2x1x256xf32>
    tpu.vector_store %arg6[%c0_27, %c0_28, %c0_29], %100 {strides = array<i32>} : memref<2x1x256xf32, #tpu.memory_space<vmem>>, vector<2x1x256xf32>,
    return
  }
  func.func @transform_0(%arg0: i32) -> (i32, i32, i32) {
    %c0_i32 = arith.constant 0 : i32
    %c0_i32_0 = arith.constant 0 : i32
    %c0_i32_1 = arith.constant 0 : i32
    return %arg0, %c0_i32, %c0_i32_0 : i32, i32, i32
  }
  func.func @transform_1(%arg0: i32) -> (i32, i32, i32) {
    %c0_i32 = arith.constant 0 : i32
    %c0_i32_0 = arith.constant 0 : i32
    %c0_i32_1 = arith.constant 0 : i32
    return %arg0, %c0_i32, %c0_i32_0 : i32, i32, i32
  }
  func.func @transform_2(%arg0: i32) -> (i32, i32, i32) {
    %c0_i32 = arith.constant 0 : i32
    %c0_i32_0 = arith.constant 0 : i32
    %c0_i32_1 = arith.constant 0 : i32
    return %arg0, %c0_i32, %c0_i32_0 : i32, i32, i32
  }
  func.func @transform_3(%arg0: i32) -> (i32, i32, i32) {
    %c0_i32 = arith.constant 0 : i32
    %c0_i32_0 = arith.constant 0 : i32
    %c0_i32_1 = arith.constant 0 : i32
    return %arg0, %c0_i32, %c0_i32_0 : i32, i32, i32
  }
  func.func @transform_4(%arg0: i32) -> (i32, i32) {
    %c0_i32 = arith.constant 0 : i32
    %c0_i32_0 = arith.constant 0 : i32
    %c0_i32_1 = arith.constant 0 : i32
    return %c0_i32, %c0_i32_0 : i32, i32
  }
  func.func @transform_5(%arg0: i32) -> (i32, i32, i32) {
    %c0_i32 = arith.constant 0 : i32
    %c0_i32_0 = arith.constant 0 : i32
    %c0_i32_1 = arith.constant 0 : i32
    return %arg0, %c0_i32, %c0_i32_0 : i32, i32, i32
  }
}

</mosaic_0001>

<llo_original>
// kernel: tpu_custom_call.1
$region0: #{tpu_custom_call.1}
  #allocation0 [shape = 'u32[]', space=smem, size = 0x4, offset = 0x4, fixed_abs, tag = 'smem constant byte address 0x4 - core index']
  #allocation1 [shape = 'u32[144,128]{1,0:T(1,128)}', space=vmem, size = 0x12000, scoped, tag = 'internal scratch']
  %s0 = inlined_call_operand.vmem [shape: f32[2,8,32], index: 0, kind: input, shape index: {}]
  %s1 = inlined_call_operand.vmem [shape: f32[2,8,32], index: 1, kind: input, shape index: {}]
  %s2 = inlined_call_operand.vmem [shape: f32[2,8,32], index: 2, kind: input, shape index: {}]
  %s3 = inlined_call_operand.vmem [shape: s32[2,8,8], index: 3, kind: input, shape index: {}]
  %s4 = inlined_call_operand.vmem [shape: f32[160,32], index: 4, kind: input, shape index: {}]
  %s5 = inlined_call_operand.hbm [shape: f32[2,1,256], index: 5, kind: output, shape index: {}]
  %s6 = sld [smem:[#allocation0]]
  $region30: #{tpu_custom_call.1} parent=0
    _
  %s8 = ssub.s32 1, %s6
  %s9 = scalar_select 0, %s8, %s6
  $region1: #{tpu_custom_call.1} parent=0
    #allocation2 [shape = 'u8[2048]{0}', space=vmem, size = 0x800, scoped, tag = 'output window, operand 0, single buffered']
    #allocation3 [shape = 's32[1]{0}', space=sflag, size = 0x4, scoped, tag = 'scoped memory for tpu_custom_call.1']
    %10 = vsyncpa [#allocation3], 0
    // Predicated region
    $region2: #{tpu_custom_call.1} parent=1 // pred_check
      _
    $region3: #{tpu_custom_call.1} parent=1 // pred_check_branch
      %12 = sbr.rel (0) target = $region5
    $region4: #{tpu_custom_call.1} parent=1 // pred_region
      _
    $region5: #{tpu_custom_call.1} parent=1 // pred_fallthru
      _
    // Predicated region
    $region6: #{tpu_custom_call.1} parent=1 // pred_check
      _
    $region7: #{tpu_custom_call.1} parent=1 // pred_check_branch
      %14 = sbr.rel (0) target = $region9
    $region8: #{tpu_custom_call.1} parent=1 // pred_region
      _
    $region9: #{tpu_custom_call.1} parent=1 // pred_fallthru
      _
    // Predicated region
    $region10: #{tpu_custom_call.1} parent=1 // pred_check
      _
    $region11: #{tpu_custom_call.1} parent=1 // pred_check_branch
      %16 = sbr.rel (0) target = $region13
    $region12: #{tpu_custom_call.1} parent=1 // pred_region
      _
    $region13: #{tpu_custom_call.1} parent=1 // pred_fallthru
      _
    // Predicated region
    $region14: #{tpu_custom_call.1} parent=1 // pred_check
      _
    $region15: #{tpu_custom_call.1} parent=1 // pred_check_branch
      %18 = sbr.rel (0) target = $region17
    $region16: #{tpu_custom_call.1} parent=1 // pred_region
      _
    $region17: #{tpu_custom_call.1} parent=1 // pred_fallthru
      _
    // Predicated region
    $region18: #{tpu_custom_call.1} parent=1 // pred_check
      _
    $region19: #{tpu_custom_call.1} parent=1 // pred_check_branch
      %20 = sbr.rel (0) target = $region21
    $region20: #{tpu_custom_call.1} parent=1 // pred_region
      _
    $region21: #{tpu_custom_call.1} parent=1 // pred_fallthru
      _
    %v21 = vld [vmem:[%s4] sm:$0xff]
    %v22 = vld [vmem:[%s4 + $0x8] sm:$0xff]
    %v23 = vld [vmem:[%s4 + $0x10] sm:$0xff]
    %v24 = vld [vmem:[%s4 + $0x18] sm:$0xff]
    %v25 = vld [vmem:[%s4 + $0x20] sm:$0xff]
    %v26 = vld [vmem:[%s4 + $0x28] sm:$0xff]
    %v27 = vld [vmem:[%s4 + $0x30] sm:$0xff]
    %v28 = vld [vmem:[%s4 + $0x38] sm:$0xff]
    %v29 = vld [vmem:[%s4 + $0x40] sm:$0xff]
    %v30 = vld [vmem:[%s4 + $0x48] sm:$0xff]
    %v31 = vld [vmem:[%s4 + $0x50] sm:$0xff]
    %v32 = vld [vmem:[%s4 + $0x58] sm:$0xff]
    %v33 = vld [vmem:[%s4 + $0x60] sm:$0xff]
    %v34 = vld [vmem:[%s4 + $0x68] sm:$0xff]
    %v35 = vld [vmem:[%s4 + $0x70] sm:$0xff]
    %v36 = vld [vmem:[%s4 + $0x78] sm:$0xff]
    %v37 = vld [vmem:[%s4 + $0x80] sm:$0x1]
    %v38 = vld [vmem:[%s0] sm:$0xff]
    %v39 = vld [vmem:[%s0 + $0x8] sm:$0xff]
    %v40 = vld [vmem:[%s1] sm:$0xff]
    %v41 = vld [vmem:[%s1 + $0x8] sm:$0xff]
    %v42 = vld [vmem:[%s2] sm:$0xff]
    %v43 = vld [vmem:[%s2 + $0x8] sm:$0xff]
    %vm44 = vcmask 261120
    %v46 = vsel %vm44, %v38, 0
    %v49 = vsel %vm44, %v39, 0
    %51 = vmatprep.subr.mxu0 0.0
    %52 = vmatpush1.msra.mxu0 %v21
    %53 = vmatprep.subr.mxu0 0.0
    %54 = vmatpush1.msra.mxu0 %v22
    %55 = vmatprep.subr.mxu0 0.0
    %56 = vmatpush1.msra.mxu0 %v23
    %57 = vmatprep.subr.mxu0 0.0
    %58 = vmatpush1.msra.mxu0 %v24
    %59 = vmatprep.subr.mxu0 0.0
    %60 = vmatpush1.msra.mxu0 0.0
    %61 = vmatprep.subr.mxu0 0.0
    %62 = vmatpush1.msra.mxu0 0.0
    %63 = vmatprep.subr.mxu0 0.0
    %64 = vmatpush1.msra.mxu0 0.0
    %65 = vmatprep.subr.mxu0 0.0
    %66 = vmatpush1.msra.mxu0 0.0
    %67 = vmatprep.subr.mxu0 0.0
    %68 = vmatpush1.msra.mxu0 0.0
    %69 = vmatprep.subr.mxu0 0.0
    %70 = vmatpush1.msra.mxu0 0.0
    %71 = vmatprep.subr.mxu0 0.0
    %72 = vmatpush1.msra.mxu0 0.0
    %73 = vmatprep.subr.mxu0 0.0
    %74 = vmatpush1.msra.mxu0 0.0
    %75 = vmatprep.subr.mxu0 0.0
    %76 = vmatpush1.msra.mxu0 0.0
    %77 = vmatprep.subr.mxu0 0.0
    %78 = vmatpush1.msra.mxu0 0.0
    %79 = vmatprep.subr.mxu0 0.0
    %80 = vmatpush1.msra.mxu0 0.0
    %81 = vmatprep.subr.mxu0 0.0
    %82 = vmatpush1.msra.mxu0 0.0
    %83 = vmatprep.subr.mxu0 0.0
    %84 = vmatpush1.msra.mxu0 0.0
    %85 = vmatprep.subr.mxu0 0.0
    %86 = vmatpush1.msra.mxu0 0.0
    %87 = vmatprep.subr.mxu0 0.0
    %88 = vmatpush1.msra.mxu0 0.0
    %89 = vmatprep.subr.mxu0 0.0
    %90 = vmatpush1.msra.mxu0 0.0
    %91 = vmatprep.subr.mxu0 0.0
    %92 = vmatpush1.msra.mxu0 0.0
    %93 = vmatprep.subr.mxu0 0.0
    %94 = vmatpush1.msra.mxu0 0.0
    %95 = vmatprep.subr.mxu0 0.0
    %96 = vmatpush1.msra.mxu0 0.0
    %97 = vmatprep.subr.mxu0 0.0
    %98 = vmatpush1.msra.mxu0 0.0
    %99 = vmatprep.subr.mxu0 0.0
    %100 = vmatpush1.msra.mxu0 0.0
    %101 = vmatprep.subr.mxu0 0.0
    %102 = vmatpush1.msra.mxu0 0.0
    %103 = vmatprep.subr.mxu0 0.0
    %104 = vmatpush1.msra.mxu0 0.0
    %105 = vmatprep.subr.mxu0 0.0
    %106 = vmatpush1.msra.mxu0 0.0
    %107 = vmatprep.subr.mxu0 0.0
    %108 = vmatpush1.msra.mxu0 0.0
    %109 = vmatprep.subr.mxu0 0.0
    %110 = vmatpush1.msra.mxu0 0.0
    %111 = vmatprep.subr.mxu0 0.0
    %112 = vmatpush1.msra.mxu0 0.0
    %113 = vmatprep.subr.mxu0 0.0
    %114 = vmatpush1.msra.mxu0 0.0
    %115 = vmatprep.mubr.f32.mxu0 0.0
    %116 = vmatmul.mubr.f32.gmra.mrb[0].mxu0 %v46
    %v117 = vpop.f32.mrb[0].mxu0
    %v118 = vadd.f32 0.0, %v117
    %v119 = vpop.f32.mrb[0].mxu0
    %120 = vmatprep.mubr.f32.mxu0 0.0
    %121 = vmatmul.mubr.f32.gmra.mrb[0].mxu0 %v49
    %v122 = vpop.f32.mrb[0].mxu0
    %v123 = vadd.f32 0.0, %v122
    %v124 = vpop.f32.mrb[0].mxu0
    %125 = vdwg.mxu0
    %v127 = vsel %vm44, %v40, 0
    %v130 = vsel %vm44, %v41, 0
    %132 = vmatprep.subr.mxu0 0.0
    %133 = vmatpush1.msra.mxu0 %v25
    %134 = vmatprep.subr.mxu0 0.0
    %135 = vmatpush1.msra.mxu0 %v26
    %136 = vmatprep.subr.mxu0 0.0
    %137 = vmatpush1.msra.mxu0 %v27
    %138 = vmatprep.subr.mxu0 0.0
    %139 = vmatpush1.msra.mxu0 %v28
    %140 = vmatprep.subr.mxu0 0.0
    %141 = vmatpush1.msra.mxu0 0.0
    %142 = vmatprep.subr.mxu0 0.0
    %143 = vmatpush1.msra.mxu0 0.0
    %144 = vmatprep.subr.mxu0 0.0
    %145 = vmatpush1.msra.mxu0 0.0
    %146 = vmatprep.subr.mxu0 0.0
    %147 = vmatpush1.msra.mxu0 0.0
    %148 = vmatprep.subr.mxu0 0.0
    %149 = vmatpush1.msra.mxu0 0.0
    %150 = vmatprep.subr.mxu0 0.0
    %151 = vmatpush1.msra.mxu0 0.0
    %152 = vmatprep.subr.mxu0 0.0
    %153 = vmatpush1.msra.mxu0 0.0
    %154 = vmatprep.subr.mxu0 0.0
    %155 = vmatpush1.msra.mxu0 0.0
    %156 = vmatprep.subr.mxu0 0.0
    %157 = vmatpush1.msra.mxu0 0.0
    %158 = vmatprep.subr.mxu0 0.0
    %159 = vmatpush1.msra.mxu0 0.0
    %160 = vmatprep.subr.mxu0 0.0
    %161 = vmatpush1.msra.mxu0 0.0
    %162 = vmatprep.subr.mxu0 0.0
    %163 = vmatpush1.msra.mxu0 0.0
    %164 = vmatprep.subr.mxu0 0.0
    %165 = vmatpush1.msra.mxu0 0.0
    %166 = vmatprep.subr.mxu0 0.0
    %167 = vmatpush1.msra.mxu0 0.0
    %168 = vmatprep.subr.mxu0 0.0
    %169 = vmatpush1.msra.mxu0 0.0
    %170 = vmatprep.subr.mxu0 0.0
    %171 = vmatpush1.msra.mxu0 0.0
    %172 = vmatprep.subr.mxu0 0.0
    %173 = vmatpush1.msra.mxu0 0.0
    %174 = vmatprep.subr.mxu0 0.0
    %175 = vmatpush1.msra.mxu0 0.0
    %176 = vmatprep.subr.mxu0 0.0
    %177 = vmatpush1.msra.mxu0 0.0
    %178 = vmatprep.subr.mxu0 0.0
    %179 = vmatpush1.msra.mxu0 0.0
    %180 = vmatprep.subr.mxu0 0.0
    %181 = vmatpush1.msra.mxu0 0.0
    %182 = vmatprep.subr.mxu0 0.0
    %183 = vmatpush1.msra.mxu0 0.0
    %184 = vmatprep.subr.mxu0 0.0
    %185 = vmatpush1.msra.mxu0 0.0
    %186 = vmatprep.subr.mxu0 0.0
    %187 = vmatpush1.msra.mxu0 0.0
    %188 = vmatprep.subr.mxu0 0.0
    %189 = vmatpush1.msra.mxu0 0.0
    %190 = vmatprep.subr.mxu0 0.0
    %191 = vmatpush1.msra.mxu0 0.0
    %192 = vmatprep.subr.mxu0 0.0
    %193 = vmatpush1.msra.mxu0 0.0
    %194 = vmatprep.subr.mxu0 0.0
    %195 = vmatpush1.msra.mxu0 0.0
    %196 = vmatprep.mubr.f32.mxu0 0.0
    %197 = vmatmul.mubr.f32.gmra.mrb[0].mxu0 %v127
    %v198 = vpop.f32.mrb[0].mxu0
    %v199 = vadd.f32 0.0, %v198
    %v200 = vpop.f32.mrb[0].mxu0
    %201 = vmatprep.mubr.f32.mxu0 0.0
    %202 = vmatmul.mubr.f32.gmra.mrb[0].mxu0 %v130
    %v203 = vpop.f32.mrb[0].mxu0
    %v204 = vadd.f32 0.0, %v203
    %v205 = vpop.f32.mrb[0].mxu0
    %206 = vdwg.mxu0
    %v208 = vsel %vm44, %v42, 0
    %v211 = vsel %vm44, %v43, 0
    %213 = vmatprep.subr.mxu0 0.0
    %214 = vmatpush1.msra.mxu0 %v29
    %215 = vmatprep.subr.mxu0 0.0
    %216 = vmatpush1.msra.mxu0 %v30
    %217 = vmatprep.subr.mxu0 0.0
    %218 = vmatpush1.msra.mxu0 %v31
    %219 = vmatprep.subr.mxu0 0.0
    %220 = vmatpush1.msra.mxu0 %v32
    %221 = vmatprep.subr.mxu0 0.0
    %222 = vmatpush1.msra.mxu0 0.0
    %223 = vmatprep.subr.mxu0 0.0
    %224 = vmatpush1.msra.mxu0 0.0
    %225 = vmatprep.subr.mxu0 0.0
    %226 = vmatpush1.msra.mxu0 0.0
    %227 = vmatprep.subr.mxu0 0.0
    %228 = vmatpush1.msra.mxu0 0.0
    %229 = vmatprep.subr.mxu0 0.0
    %230 = vmatpush1.msra.mxu0 0.0
    %231 = vmatprep.subr.mxu0 0.0
    %232 = vmatpush1.msra.mxu0 0.0
    %233 = vmatprep.subr.mxu0 0.0
    %234 = vmatpush1.msra.mxu0 0.0
    %235 = vmatprep.subr.mxu0 0.0
    %236 = vmatpush1.msra.mxu0 0.0
    %237 = vmatprep.subr.mxu0 0.0
    %238 = vmatpush1.msra.mxu0 0.0
    %239 = vmatprep.subr.mxu0 0.0
    %240 = vmatpush1.msra.mxu0 0.0
    %241 = vmatprep.subr.mxu0 0.0
    %242 = vmatpush1.msra.mxu0 0.0
    %243 = vmatprep.subr.mxu0 0.0
    %244 = vmatpush1.msra.mxu0 0.0
    %245 = vmatprep.subr.mxu0 0.0
    %246 = vmatpush1.msra.mxu0 0.0
    %247 = vmatprep.subr.mxu0 0.0
    %248 = vmatpush1.msra.mxu0 0.0
    %249 = vmatprep.subr.mxu0 0.0
    %250 = vmatpush1.msra.mxu0 0.0
    %251 = vmatprep.subr.mxu0 0.0
    %252 = vmatpush1.msra.mxu0 0.0
    %253 = vmatprep.subr.mxu0 0.0
    %254 = vmatpush1.msra.mxu0 0.0
    %255 = vmatprep.subr.mxu0 0.0
    %256 = vmatpush1.msra.mxu0 0.0
    %257 = vmatprep.subr.mxu0 0.0
    %258 = vmatpush1.msra.mxu0 0.0
    %259 = vmatprep.subr.mxu0 0.0
    %260 = vmatpush1.msra.mxu0 0.0
    %261 = vmatprep.subr.mxu0 0.0
    %262 = vmatpush1.msra.mxu0 0.0
    %263 = vmatprep.subr.mxu0 0.0
    %264 = vmatpush1.msra.mxu0 0.0
    %265 = vmatprep.subr.mxu0 0.0
    %266 = vmatpush1.msra.mxu0 0.0
    %267 = vmatprep.subr.mxu0 0.0
    %268 = vmatpush1.msra.mxu0 0.0
    %269 = vmatprep.subr.mxu0 0.0
    %270 = vmatpush1.msra.mxu0 0.0
    %271 = vmatprep.subr.mxu0 0.0
    %272 = vmatpush1.msra.mxu0 0.0
    %273 = vmatprep.subr.mxu0 0.0
    %274 = vmatpush1.msra.mxu0 0.0
    %275 = vmatprep.subr.mxu0 0.0
    %276 = vmatpush1.msra.mxu0 0.0
    %277 = vmatprep.mubr.f32.mxu0 0.0
    %278 = vmatmul.mubr.f32.gmra.mrb[0].mxu0 %v208
    %v279 = vpop.f32.mrb[0].mxu0
    %v280 = vadd.f32 0.0, %v279
    %v281 = vpop.f32.mrb[0].mxu0
    %282 = vmatprep.mubr.f32.mxu0 0.0
    %283 = vmatmul.mubr.f32.gmra.mrb[0].mxu0 %v211
    %v284 = vpop.f32.mrb[0].mxu0
    %v285 = vadd.f32 0.0, %v284
    %v286 = vpop.f32.mrb[0].mxu0
    %287 = vdwg.mxu0
    %290 = vrot.lane.b32.xlu0 %v118, 120
    %v291 = vpop.permute.xlu0 %290
    %292 = vrot.lane.b32.xlu0 %v123, 120
    %v293 = vpop.permute.xlu0 %292
    %294 = vrot.lane.b32.xlu0 %v118, 112
    %v295 = vpop.permute.xlu0 %294
    %296 = vrot.lane.b32.xlu0 %v123, 112
    %v297 = vpop.permute.xlu0 %296
    %298 = vrot.lane.b32.xlu0 %v118, 104
    %v299 = vpop.permute.xlu0 %298
    %300 = vrot.lane.b32.xlu0 %v123, 104
    %v301 = vpop.permute.xlu0 %300
    %304 = vrot.lane.b32.xlu0 %v199, 120
    %v305 = vpop.permute.xlu0 %304
    %306 = vrot.lane.b32.xlu0 %v204, 120
    %v307 = vpop.permute.xlu0 %306
    %308 = vrot.lane.b32.xlu0 %v199, 112
    %v309 = vpop.permute.xlu0 %308
    %310 = vrot.lane.b32.xlu0 %v204, 112
    %v311 = vpop.permute.xlu0 %310
    %312 = vrot.lane.b32.xlu0 %v199, 104
    %v313 = vpop.permute.xlu0 %312
    %314 = vrot.lane.b32.xlu0 %v204, 104
    %v315 = vpop.permute.xlu0 %314
    %318 = vrot.lane.b32.xlu0 %v280, 120
    %v319 = vpop.permute.xlu0 %318
    %320 = vrot.lane.b32.xlu0 %v285, 120
    %v321 = vpop.permute.xlu0 %320
    %324 = vrot.lane.b32.xlu0 %v280, 112
    %v325 = vpop.permute.xlu0 %324
    %326 = vrot.lane.b32.xlu0 %v285, 112
    %v327 = vpop.permute.xlu0 %326
    %330 = vrot.lane.b32.xlu0 %v280, 104
    %v331 = vpop.permute.xlu0 %330
    %332 = vrot.lane.b32.xlu0 %v285, 104
    %v333 = vpop.permute.xlu0 %332
    %vm336 = vcmask 64512
    %v337 = vsel %vm336, %v118, 0
    %v339 = vsel %vm336, %v199, 0
    %341 = vmatprep.subr.mxu0 0.0
    %342 = vmatpush1.xpose.msra.mxu0 %v339
    %343 = vmatprep.subr.mxu0 0.0
    %344 = vmatpush1.xpose.msra.mxu0 0.0
    %345 = vmatprep.subr.mxu0 0.0
    %346 = vmatpush1.xpose.msra.mxu0 0.0
    %347 = vmatprep.subr.mxu0 0.0
    %348 = vmatpush1.xpose.msra.mxu0 0.0
    %349 = vmatprep.subr.mxu0 0.0
    %350 = vmatpush1.xpose.msra.mxu0 0.0
    %351 = vmatprep.subr.mxu0 0.0
    %352 = vmatpush1.xpose.msra.mxu0 0.0
    %353 = vmatprep.subr.mxu0 0.0
    %354 = vmatpush1.xpose.msra.mxu0 0.0
    %355 = vmatprep.subr.mxu0 0.0
    %356 = vmatpush1.xpose.msra.mxu0 0.0
    %357 = vmatprep.subr.mxu0 0.0
    %358 = vmatpush1.xpose.msra.mxu0 0.0
    %359 = vmatprep.subr.mxu0 0.0
    %360 = vmatpush1.xpose.msra.mxu0 0.0
    %361 = vmatprep.subr.mxu0 0.0
    %362 = vmatpush1.xpose.msra.mxu0 0.0
    %363 = vmatprep.subr.mxu0 0.0
    %364 = vmatpush1.xpose.msra.mxu0 0.0
    %365 = vmatprep.subr.mxu0 0.0
    %366 = vmatpush1.xpose.msra.mxu0 0.0
    %367 = vmatprep.subr.mxu0 0.0
    %368 = vmatpush1.xpose.msra.mxu0 0.0
    %369 = vmatprep.subr.mxu0 0.0
    %370 = vmatpush1.xpose.msra.mxu0 0.0
    %371 = vmatprep.subr.mxu0 0.0
    %372 = vmatpush1.xpose.msra.mxu0 0.0
    %373 = vmatprep.subr.mxu0 0.0
    %374 = vmatpush1.xpose.msra.mxu0 0.0
    %375 = vmatprep.subr.mxu0 0.0
    %376 = vmatpush1.xpose.msra.mxu0 0.0
    %377 = vmatprep.subr.mxu0 0.0
    %378 = vmatpush1.xpose.msra.mxu0 0.0
    %379 = vmatprep.subr.mxu0 0.0
    %380 = vmatpush1.xpose.msra.mxu0 0.0
    %381 = vmatprep.subr.mxu0 0.0
    %382 = vmatpush1.xpose.msra.mxu0 0.0
    %383 = vmatprep.subr.mxu0 0.0
    %384 = vmatpush1.xpose.msra.mxu0 0.0
    %385 = vmatprep.subr.mxu0 0.0
    %386 = vmatpush1.xpose.msra.mxu0 0.0
    %387 = vmatprep.subr.mxu0 0.0
    %388 = vmatpush1.xpose.msra.mxu0 0.0
    %389 = vmatprep.subr.mxu0 0.0
    %390 = vmatpush1.xpose.msra.mxu0 0.0
    %391 = vmatprep.subr.mxu0 0.0
    %392 = vmatpush1.xpose.msra.mxu0 0.0
    %393 = vmatprep.subr.mxu0 0.0
    %394 = vmatpush1.xpose.msra.mxu0 0.0
    %395 = vmatprep.subr.mxu0 0.0
    %396 = vmatpush1.xpose.msra.mxu0 0.0
    %397 = vmatprep.subr.mxu0 0.0
    %398 = vmatpush1.xpose.msra.mxu0 0.0
    %399 = vmatprep.subr.mxu0 0.0
    %400 = vmatpush1.xpose.msra.mxu0 0.0
    %401 = vmatprep.subr.mxu0 0.0
    %402 = vmatpush1.xpose.msra.mxu0 0.0
    %403 = vmatprep.subr.mxu0 0.0
    %404 = vmatpush1.xpose.msra.mxu0 0.0
    %405 = vmatprep.mubr.f32.mxu0 0.0
    %406 = vmatmul.mubr.f32.gmra.mrb[0].mxu0 %v337
    %v407 = vpop.f32.mrb[0].mxu0
    %v408 = vadd.f32 0.0, %v407
    %v409 = vpop.f32.mrb[0].mxu0
    %410 = vdwg.mxu0
    %v411 = vsel %vm336, %v123, 0
    %v413 = vsel %vm336, %v204, 0
    %415 = vmatprep.subr.mxu0 0.0
    %416 = vmatpush1.xpose.msra.mxu0 %v413
    %417 = vmatprep.subr.mxu0 0.0
    %418 = vmatpush1.xpose.msra.mxu0 0.0
    %419 = vmatprep.subr.mxu0 0.0
    %420 = vmatpush1.xpose.msra.mxu0 0.0
    %421 = vmatprep.subr.mxu0 0.0
    %422 = vmatpush1.xpose.msra.mxu0 0.0
    %423 = vmatprep.subr.mxu0 0.0
    %424 = vmatpush1.xpose.msra.mxu0 0.0
    %425 = vmatprep.subr.mxu0 0.0
    %426 = vmatpush1.xpose.msra.mxu0 0.0
    %427 = vmatprep.subr.mxu0 0.0
    %428 = vmatpush1.xpose.msra.mxu0 0.0
    %429 = vmatprep.subr.mxu0 0.0
    %430 = vmatpush1.xpose.msra.mxu0 0.0
    %431 = vmatprep.subr.mxu0 0.0
    %432 = vmatpush1.xpose.msra.mxu0 0.0
    %433 = vmatprep.subr.mxu0 0.0
    %434 = vmatpush1.xpose.msra.mxu0 0.0
    %435 = vmatprep.subr.mxu0 0.0
    %436 = vmatpush1.xpose.msra.mxu0 0.0
    %437 = vmatprep.subr.mxu0 0.0
    %438 = vmatpush1.xpose.msra.mxu0 0.0
    %439 = vmatprep.subr.mxu0 0.0
    %440 = vmatpush1.xpose.msra.mxu0 0.0
    %441 = vmatprep.subr.mxu0 0.0
    %442 = vmatpush1.xpose.msra.mxu0 0.0
    %443 = vmatprep.subr.mxu0 0.0
    %444 = vmatpush1.xpose.msra.mxu0 0.0
    %445 = vmatprep.subr.mxu0 0.0
    %446 = vmatpush1.xpose.msra.mxu0 0.0
    %447 = vmatprep.subr.mxu0 0.0
    %448 = vmatpush1.xpose.msra.mxu0 0.0
    %449 = vmatprep.subr.mxu0 0.0
    %450 = vmatpush1.xpose.msra.mxu0 0.0
    %451 = vmatprep.subr.mxu0 0.0
    %452 = vmatpush1.xpose.msra.mxu0 0.0
    %453 = vmatprep.subr.mxu0 0.0
    %454 = vmatpush1.xpose.msra.mxu0 0.0
    %455 = vmatprep.subr.mxu0 0.0
    %456 = vmatpush1.xpose.msra.mxu0 0.0
    %457 = vmatprep.subr.mxu0 0.0
    %458 = vmatpush1.xpose.msra.mxu0 0.0
    %459 = vmatprep.subr.mxu0 0.0
    %460 = vmatpush1.xpose.msra.mxu0 0.0
    %461 = vmatprep.subr.mxu0 0.0
    %462 = vmatpush1.xpose.msra.mxu0 0.0
    %463 = vmatprep.subr.mxu0 0.0
    %464 = vmatpush1.xpose.msra.mxu0 0.0
    %465 = vmatprep.subr.mxu0 0.0
    %466 = vmatpush1.xpose.msra.mxu0 0.0
    %467 = vmatprep.subr.mxu0 0.0
    %468 = vmatpush1.xpose.msra.mxu0 0.0
    %469 = vmatprep.subr.mxu0 0.0
    %470 = vmatpush1.xpose.msra.mxu0 0.0
    %471 = vmatprep.subr.mxu0 0.0
    %472 = vmatpush1.xpose.msra.mxu0 0.0
    %473 = vmatprep.subr.mxu0 0.0
    %474 = vmatpush1.xpose.msra.mxu0 0.0
    %475 = vmatprep.subr.mxu0 0.0
    %476 = vmatpush1.xpose.msra.mxu0 0.0
    %477 = vmatprep.subr.mxu0 0.0
    %478 = vmatpush1.xpose.msra.mxu0 0.0
    %479 = vmatprep.mubr.f32.mxu0 0.0
    %480 = vmatmul.mubr.f32.gmra.mrb[0].mxu0 %v411
    %v481 = vpop.f32.mrb[0].mxu0
    %v482 = vadd.f32 0.0, %v481
    %v483 = vpop.f32.mrb[0].mxu0
    %484 = vdwg.mxu0
    %v485 = vsel %vm336, %v291, 0
    %v487 = vsel %vm336, %v305, 0
    %489 = vmatprep.subr.mxu0 0.0
    %490 = vmatpush1.xpose.msra.mxu0 %v487
    %491 = vmatprep.subr.mxu0 0.0
    %492 = vmatpush1.xpose.msra.mxu0 0.0
    %493 = vmatprep.subr.mxu0 0.0
    %494 = vmatpush1.xpose.msra.mxu0 0.0
    %495 = vmatprep.subr.mxu0 0.0
    %496 = vmatpush1.xpose.msra.mxu0 0.0
    %497 = vmatprep.subr.mxu0 0.0
    %498 = vmatpush1.xpose.msra.mxu0 0.0
    %499 = vmatprep.subr.mxu0 0.0
    %500 = vmatpush1.xpose.msra.mxu0 0.0
    %501 = vmatprep.subr.mxu0 0.0
    %502 = vmatpush1.xpose.msra.mxu0 0.0
    %503 = vmatprep.subr.mxu0 0.0
    %504 = vmatpush1.xpose.msra.mxu0 0.0
    %505 = vmatprep.subr.mxu0 0.0
    %506 = vmatpush1.xpose.msra.mxu0 0.0
    %507 = vmatprep.subr.mxu0 0.0
    %508 = vmatpush1.xpose.msra.mxu0 0.0
    %509 = vmatprep.subr.mxu0 0.0
    %510 = vmatpush1.xpose.msra.mxu0 0.0
    %511 = vmatprep.subr.mxu0 0.0
    %512 = vmatpush1.xpose.msra.mxu0 0.0
    %513 = vmatprep.subr.mxu0 0.0
    %514 = vmatpush1.xpose.msra.mxu0 0.0
    %515 = vmatprep.subr.mxu0 0.0
    %516 = vmatpush1.xpose.msra.mxu0 0.0
    %517 = vmatprep.subr.mxu0 0.0
    %518 = vmatpush1.xpose.msra.mxu0 0.0
    %519 = vmatprep.subr.mxu0 0.0
    %520 = vmatpush1.xpose.msra.mxu0 0.0
    %521 = vmatprep.subr.mxu0 0.0
    %522 = vmatpush1.xpose.msra.mxu0 0.0
    %523 = vmatprep.subr.mxu0 0.0
    %524 = vmatpush1.xpose.msra.mxu0 0.0
    %525 = vmatprep.subr.mxu0 0.0
    %526 = vmatpush1.xpose.msra.mxu0 0.0
    %527 = vmatprep.subr.mxu0 0.0
    %528 = vmatpush1.xpose.msra.mxu0 0.0
    %529 = vmatprep.subr.mxu0 0.0
    %530 = vmatpush1.xpose.msra.mxu0 0.0
    %531 = vmatprep.subr.mxu0 0.0
    %532 = vmatpush1.xpose.msra.mxu0 0.0
    %533 = vmatprep.subr.mxu0 0.0
    %534 = vmatpush1.xpose.msra.mxu0 0.0
    %535 = vmatprep.subr.mxu0 0.0
    %536 = vmatpush1.xpose.msra.mxu0 0.0
    %537 = vmatprep.subr.mxu0 0.0
    %538 = vmatpush1.xpose.msra.mxu0 0.0
    %539 = vmatprep.subr.mxu0 0.0
    %540 = vmatpush1.xpose.msra.mxu0 0.0
    %541 = vmatprep.subr.mxu0 0.0
    %542 = vmatpush1.xpose.msra.mxu0 0.0
    %543 = vmatprep.subr.mxu0 0.0
    %544 = vmatpush1.xpose.msra.mxu0 0.0
    %545 = vmatprep.subr.mxu0 0.0
    %546 = vmatpush1.xpose.msra.mxu0 0.0
    %547 = vmatprep.subr.mxu0 0.0
    %548 = vmatpush1.xpose.msra.mxu0 0.0
    %549 = vmatprep.subr.mxu0 0.0
    %550 = vmatpush1.xpose.msra.mxu0 0.0
    %551 = vmatprep.subr.mxu0 0.0
    %552 = vmatpush1.xpose.msra.mxu0 0.0
    %553 = vmatprep.mubr.f32.mxu0 0.0
    %554 = vmatmul.mubr.f32.gmra.mrb[0].mxu0 %v485
    %v555 = vpop.f32.mrb[0].mxu0
    %v556 = vadd.f32 0.0, %v555
    %v557 = vpop.f32.mrb[0].mxu0
    %558 = vdwg.mxu0
    %v559 = vsel %vm336, %v293, 0
    %v561 = vsel %vm336, %v307, 0
    %563 = vmatprep.subr.mxu0 0.0
    %564 = vmatpush1.xpose.msra.mxu0 %v561
    %565 = vmatprep.subr.mxu0 0.0
    %566 = vmatpush1.xpose.msra.mxu0 0.0
    %567 = vmatprep.subr.mxu0 0.0
    %568 = vmatpush1.xpose.msra.mxu0 0.0
    %569 = vmatprep.subr.mxu0 0.0
    %570 = vmatpush1.xpose.msra.mxu0 0.0
    %571 = vmatprep.subr.mxu0 0.0
    %572 = vmatpush1.xpose.msra.mxu0 0.0
    %573 = vmatprep.subr.mxu0 0.0
    %574 = vmatpush1.xpose.msra.mxu0 0.0
    %575 = vmatprep.subr.mxu0 0.0
    %576 = vmatpush1.xpose.msra.mxu0 0.0
    %577 = vmatprep.subr.mxu0 0.0
    %578 = vmatpush1.xpose.msra.mxu0 0.0
    %579 = vmatprep.subr.mxu0 0.0
    %580 = vmatpush1.xpose.msra.mxu0 0.0
    %581 = vmatprep.subr.mxu0 0.0
    %582 = vmatpush1.xpose.msra.mxu0 0.0
    %583 = vmatprep.subr.mxu0 0.0
    %584 = vmatpush1.xpose.msra.mxu0 0.0
    %585 = vmatprep.subr.mxu0 0.0
    %586 = vmatpush1.xpose.msra.mxu0 0.0
    %587 = vmatprep.subr.mxu0 0.0
    %588 = vmatpush1.xpose.msra.mxu0 0.0
    %589 = vmatprep.subr.mxu0 0.0
    %590 = vmatpush1.xpose.msra.mxu0 0.0
    %591 = vmatprep.subr.mxu0 0.0
    %592 = vmatpush1.xpose.msra.mxu0 0.0
    %593 = vmatprep.subr.mxu0 0.0
    %594 = vmatpush1.xpose.msra.mxu0 0.0
    %595 = vmatprep.subr.mxu0 0.0
    %596 = vmatpush1.xpose.msra.mxu0 0.0
    %597 = vmatprep.subr.mxu0 0.0
    %598 = vmatpush1.xpose.msra.mxu0 0.0
    %599 = vmatprep.subr.mxu0 0.0
    %600 = vmatpush1.xpose.msra.mxu0 0.0
    %601 = vmatprep.subr.mxu0 0.0
    %602 = vmatpush1.xpose.msra.mxu0 0.0
    %603 = vmatprep.subr.mxu0 0.0
    %604 = vmatpush1.xpose.msra.mxu0 0.0
    %605 = vmatprep.subr.mxu0 0.0
    %606 = vmatpush1.xpose.msra.mxu0 0.0
    %607 = vmatprep.subr.mxu0 0.0
    %608 = vmatpush1.xpose.msra.mxu0 0.0
    %609 = vmatprep.subr.mxu0 0.0
    %610 = vmatpush1.xpose.msra.mxu0 0.0
    %611 = vmatprep.subr.mxu0 0.0
    %612 = vmatpush1.xpose.msra.mxu0 0.0
    %613 = vmatprep.subr.mxu0 0.0
    %614 = vmatpush1.xpose.msra.mxu0 0.0
    %615 = vmatprep.subr.mxu0 0.0
    %616 = vmatpush1.xpose.msra.mxu0 0.0
    %617 = vmatprep.subr.mxu0 0.0
    %618 = vmatpush1.xpose.msra.mxu0 0.0
    %619 = vmatprep.subr.mxu0 0.0
    %620 = vmatpush1.xpose.msra.mxu0 0.0
    %621 = vmatprep.subr.mxu0 0.0
    %622 = vmatpush1.xpose.msra.mxu0 0.0
    %623 = vmatprep.subr.mxu0 0.0
    %624 = vmatpush1.xpose.msra.mxu0 0.0
    %625 = vmatprep.subr.mxu0 0.0
    %626 = vmatpush1.xpose.msra.mxu0 0.0
    %627 = vmatprep.mubr.f32.mxu0 0.0
    %628 = vmatmul.mubr.f32.gmra.mrb[0].mxu0 %v559
    %v629 = vpop.f32.mrb[0].mxu0
    %v630 = vadd.f32 0.0, %v629
    %v631 = vpop.f32.mrb[0].mxu0
    %632 = vdwg.mxu0
    %v633 = vsel %vm336, %v295, 0
    %v635 = vsel %vm336, %v309, 0
    %637 = vmatprep.subr.mxu0 0.0
    %638 = vmatpush1.xpose.msra.mxu0 %v635
    %639 = vmatprep.subr.mxu0 0.0
    %640 = vmatpush1.xpose.msra.mxu0 0.0
    %641 = vmatprep.subr.mxu0 0.0
    %642 = vmatpush1.xpose.msra.mxu0 0.0
    %643 = vmatprep.subr.mxu0 0.0
    %644 = vmatpush1.xpose.msra.mxu0 0.0
    %645 = vmatprep.subr.mxu0 0.0
    %646 = vmatpush1.xpose.msra.mxu0 0.0
    %647 = vmatprep.subr.mxu0 0.0
    %648 = vmatpush1.xpose.msra.mxu0 0.0
    %649 = vmatprep.subr.mxu0 0.0
    %650 = vmatpush1.xpose.msra.mxu0 0.0
    %651 = vmatprep.subr.mxu0 0.0
    %652 = vmatpush1.xpose.msra.mxu0 0.0
    %653 = vmatprep.subr.mxu0 0.0
    %654 = vmatpush1.xpose.msra.mxu0 0.0
    %655 = vmatprep.subr.mxu0 0.0
    %656 = vmatpush1.xpose.msra.mxu0 0.0
    %657 = vmatprep.subr.mxu0 0.0
    %658 = vmatpush1.xpose.msra.mxu0 0.0
    %659 = vmatprep.subr.mxu0 0.0
    %660 = vmatpush1.xpose.msra.mxu0 0.0
    %661 = vmatprep.subr.mxu0 0.0
    %662 = vmatpush1.xpose.msra.mxu0 0.0
    %663 = vmatprep.subr.mxu0 0.0
    %664 = vmatpush1.xpose.msra.mxu0 0.0
    %665 = vmatprep.subr.mxu0 0.0
    %666 = vmatpush1.xpose.msra.mxu0 0.0
    %667 = vmatprep.subr.mxu0 0.0
    %668 = vmatpush1.xpose.msra.mxu0 0.0
    %669 = vmatprep.subr.mxu0 0.0
    %670 = vmatpush1.xpose.msra.mxu0 0.0
    %671 = vmatprep.subr.mxu0 0.0
    %672 = vmatpush1.xpose.msra.mxu0 0.0
    %673 = vmatprep.subr.mxu0 0.0
    %674 = vmatpush1.xpose.msra.mxu0 0.0
    %675 = vmatprep.subr.mxu0 0.0
    %676 = vmatpush1.xpose.msra.mxu0 0.0
    %677 = vmatprep.subr.mxu0 0.0
    %678 = vmatpush1.xpose.msra.mxu0 0.0
    %679 = vmatprep.subr.mxu0 0.0
    %680 = vmatpush1.xpose.msra.mxu0 0.0
    %681 = vmatprep.subr.mxu0 0.0
    %682 = vmatpush1.xpose.msra.mxu0 0.0
    %683 = vmatprep.subr.mxu0 0.0
    %684 = vmatpush1.xpose.msra.mxu0 0.0
    %685 = vmatprep.subr.mxu0 0.0
    %686 = vmatpush1.xpose.msra.mxu0 0.0
    %687 = vmatprep.subr.mxu0 0.0
    %688 = vmatpush1.xpose.msra.mxu0 0.0
    %689 = vmatprep.subr.mxu0 0.0
    %690 = vmatpush1.xpose.msra.mxu0 0.0
    %691 = vmatprep.subr.mxu0 0.0
    %692 = vmatpush1.xpose.msra.mxu0 0.0
    %693 = vmatprep.subr.mxu0 0.0
    %694 = vmatpush1.xpose.msra.mxu0 0.0
    %695 = vmatprep.subr.mxu0 0.0
    %696 = vmatpush1.xpose.msra.mxu0 0.0
    %697 = vmatprep.subr.mxu0 0.0
    %698 = vmatpush1.xpose.msra.mxu0 0.0
    %699 = vmatprep.subr.mxu0 0.0
    %700 = vmatpush1.xpose.msra.mxu0 0.0
    %701 = vmatprep.mubr.f32.mxu0 0.0
    %702 = vmatmul.mubr.f32.gmra.mrb[0].mxu0 %v633
    %v703 = vpop.f32.mrb[0].mxu0
    %v704 = vadd.f32 0.0, %v703
    %v705 = vpop.f32.mrb[0].mxu0
    %706 = vdwg.mxu0
    %v707 = vsel %vm336, %v297, 0
    %v709 = vsel %vm336, %v311, 0
    %711 = vmatprep.subr.mxu0 0.0
    %712 = vmatpush1.xpose.msra.mxu0 %v709
    %713 = vmatprep.subr.mxu0 0.0
    %714 = vmatpush1.xpose.msra.mxu0 0.0
    %715 = vmatprep.subr.mxu0 0.0
    %716 = vmatpush1.xpose.msra.mxu0 0.0
    %717 = vmatprep.subr.mxu0 0.0
    %718 = vmatpush1.xpose.msra.mxu0 0.0
    %719 = vmatprep.subr.mxu0 0.0
    %720 = vmatpush1.xpose.msra.mxu0 0.0
    %721 = vmatprep.subr.mxu0 0.0
    %722 = vmatpush1.xpose.msra.mxu0 0.0
    %723 = vmatprep.subr.mxu0 0.0
    %724 = vmatpush1.xpose.msra.mxu0 0.0
    %725 = vmatprep.subr.mxu0 0.0
    %726 = vmatpush1.xpose.msra.mxu0 0.0
    %727 = vmatprep.subr.mxu0 0.0
    %728 = vmatpush1.xpose.msra.mxu0 0.0
    %729 = vmatprep.subr.mxu0 0.0
    %730 = vmatpush1.xpose.msra.mxu0 0.0
    %731 = vmatprep.subr.mxu0 0.0
    %732 = vmatpush1.xpose.msra.mxu0 0.0
    %733 = vmatprep.subr.mxu0 0.0
    %734 = vmatpush1.xpose.msra.mxu0 0.0
    %735 = vmatprep.subr.mxu0 0.0
    %736 = vmatpush1.xpose.msra.mxu0 0.0
    %737 = vmatprep.subr.mxu0 0.0
    %738 = vmatpush1.xpose.msra.mxu0 0.0
    %739 = vmatprep.subr.mxu0 0.0
    %740 = vmatpush1.xpose.msra.mxu0 0.0
    %741 = vmatprep.subr.mxu0 0.0
    %742 = vmatpush1.xpose.msra.mxu0 0.0
    %743 = vmatprep.subr.mxu0 0.0
    %744 = vmatpush1.xpose.msra.mxu0 0.0
    %745 = vmatprep.subr.mxu0 0.0
    %746 = vmatpush1.xpose.msra.mxu0 0.0
    %747 = vmatprep.subr.mxu0 0.0
    %748 = vmatpush1.xpose.msra.mxu0 0.0
    %749 = vmatprep.subr.mxu0 0.0
    %750 = vmatpush1.xpose.msra.mxu0 0.0
    %751 = vmatprep.subr.mxu0 0.0
    %752 = vmatpush1.xpose.msra.mxu0 0.0
    %753 = vmatprep.subr.mxu0 0.0
    %754 = vmatpush1.xpose.msra.mxu0 0.0
    %755 = vmatprep.subr.mxu0 0.0
    %756 = vmatpush1.xpose.msra.mxu0 0.0
    %757 = vmatprep.subr.mxu0 0.0
    %758 = vmatpush1.xpose.msra.mxu0 0.0
    %759 = vmatprep.subr.mxu0 0.0
    %760 = vmatpush1.xpose.msra.mxu0 0.0
    %761 = vmatprep.subr.mxu0 0.0
    %762 = vmatpush1.xpose.msra.mxu0 0.0
    %763 = vmatprep.subr.mxu0 0.0
    %764 = vmatpush1.xpose.msra.mxu0 0.0
    %765 = vmatprep.subr.mxu0 0.0
    %766 = vmatpush1.xpose.msra.mxu0 0.0
    %767 = vmatprep.subr.mxu0 0.0
    %768 = vmatpush1.xpose.msra.mxu0 0.0
    %769 = vmatprep.subr.mxu0 0.0
    %770 = vmatpush1.xpose.msra.mxu0 0.0
    %771 = vmatprep.subr.mxu0 0.0
    %772 = vmatpush1.xpose.msra.mxu0 0.0
    %773 = vmatprep.subr.mxu0 0.0
    %774 = vmatpush1.xpose.msra.mxu0 0.0
    %775 = vmatprep.mubr.f32.mxu0 0.0
    %776 = vmatmul.mubr.f32.gmra.mrb[0].mxu0 %v707
    %v777 = vpop.f32.mrb[0].mxu0
    %v778 = vadd.f32 0.0, %v777
    %v779 = vpop.f32.mrb[0].mxu0
    %780 = vdwg.mxu0
    %v781 = vsel %vm336, %v299, 0
    %v783 = vsel %vm336, %v313, 0
    %785 = vmatprep.subr.mxu0 0.0
    %786 = vmatpush1.xpose.msra.mxu0 %v783
    %787 = vmatprep.subr.mxu0 0.0
    %788 = vmatpush1.xpose.msra.mxu0 0.0
    %789 = vmatprep.subr.mxu0 0.0
    %790 = vmatpush1.xpose.msra.mxu0 0.0
    %791 = vmatprep.subr.mxu0 0.0
    %792 = vmatpush1.xpose.msra.mxu0 0.0
    %793 = vmatprep.subr.mxu0 0.0
    %794 = vmatpush1.xpose.msra.mxu0 0.0
    %795 = vmatprep.subr.mxu0 0.0
    %796 = vmatpush1.xpose.msra.mxu0 0.0
    %797 = vmatprep.subr.mxu0 0.0
    %798 = vmatpush1.xpose.msra.mxu0 0.0
    %799 = vmatprep.subr.mxu0 0.0
    %800 = vmatpush1.xpose.msra.mxu0 0.0
    %801 = vmatprep.subr.mxu0 0.0
    %802 = vmatpush1.xpose.msra.mxu0 0.0
    %803 = vmatprep.subr.mxu0 0.0
    %804 = vmatpush1.xpose.msra.mxu0 0.0
    %805 = vmatprep.subr.mxu0 0.0
    %806 = vmatpush1.xpose.msra.mxu0 0.0
    %807 = vmatprep.subr.mxu0 0.0
    %808 = vmatpush1.xpose.msra.mxu0 0.0
    %809 = vmatprep.subr.mxu0 0.0
    %810 = vmatpush1.xpose.msra.mxu0 0.0
    %811 = vmatprep.subr.mxu0 0.0
    %812 = vmatpush1.xpose.msra.mxu0 0.0
    %813 = vmatprep.subr.mxu0 0.0
    %814 = vmatpush1.xpose.msra.mxu0 0.0
    %815 = vmatprep.subr.mxu0 0.0
    %816 = vmatpush1.xpose.msra.mxu0 0.0
    %817 = vmatprep.subr.mxu0 0.0
    %818 = vmatpush1.xpose.msra.mxu0 0.0
    %819 = vmatprep.subr.mxu0 0.0
    %820 = vmatpush1.xpose.msra.mxu0 0.0
    %821 = vmatprep.subr.mxu0 0.0
    %822 = vmatpush1.xpose.msra.mxu0 0.0
    %823 = vmatprep.subr.mxu0 0.0
    %824 = vmatpush1.xpose.msra.mxu0 0.0
    %825 = vmatprep.subr.mxu0 0.0
    %826 = vmatpush1.xpose.msra.mxu0 0.0
    %827 = vmatprep.subr.mxu0 0.0
    %828 = vmatpush1.xpose.msra.mxu0 0.0
    %829 = vmatprep.subr.mxu0 0.0
    %830 = vmatpush1.xpose.msra.mxu0 0.0
    %831 = vmatprep.subr.mxu0 0.0
    %832 = vmatpush1.xpose.msra.mxu0 0.0
    %833 = vmatprep.subr.mxu0 0.0
    %834 = vmatpush1.xpose.msra.mxu0 0.0
    %835 = vmatprep.subr.mxu0 0.0
    %836 = vmatpush1.xpose.msra.mxu0 0.0
    %837 = vmatprep.subr.mxu0 0.0
    %838 = vmatpush1.xpose.msra.mxu0 0.0
    %839 = vmatprep.subr.mxu0 0.0
    %840 = vmatpush1.xpose.msra.mxu0 0.0
    %841 = vmatprep.subr.mxu0 0.0
    %842 = vmatpush1.xpose.msra.mxu0 0.0
    %843 = vmatprep.subr.mxu0 0.0
    %844 = vmatpush1.xpose.msra.mxu0 0.0
    %845 = vmatprep.subr.mxu0 0.0
    %846 = vmatpush1.xpose.msra.mxu0 0.0
    %847 = vmatprep.subr.mxu0 0.0
    %848 = vmatpush1.xpose.msra.mxu0 0.0
    %849 = vmatprep.mubr.f32.mxu0 0.0
    %850 = vmatmul.mubr.f32.gmra.mrb[0].mxu0 %v781
    %v851 = vpop.f32.mrb[0].mxu0
    %v852 = vadd.f32 0.0, %v851
    %v853 = vpop.f32.mrb[0].mxu0
    %854 = vdwg.mxu0
    %v855 = vsel %vm336, %v301, 0
    %v857 = vsel %vm336, %v315, 0
    %859 = vmatprep.subr.mxu0 0.0
    %860 = vmatpush1.xpose.msra.mxu0 %v857
    %861 = vmatprep.subr.mxu0 0.0
    %862 = vmatpush1.xpose.msra.mxu0 0.0
    %863 = vmatprep.subr.mxu0 0.0
    %864 = vmatpush1.xpose.msra.mxu0 0.0
    %865 = vmatprep.subr.mxu0 0.0
    %866 = vmatpush1.xpose.msra.mxu0 0.0
    %867 = vmatprep.subr.mxu0 0.0
    %868 = vmatpush1.xpose.msra.mxu0 0.0
    %869 = vmatprep.subr.mxu0 0.0
    %870 = vmatpush1.xpose.msra.mxu0 0.0
    %871 = vmatprep.subr.mxu0 0.0
    %872 = vmatpush1.xpose.msra.mxu0 0.0
    %873 = vmatprep.subr.mxu0 0.0
    %874 = vmatpush1.xpose.msra.mxu0 0.0
    %875 = vmatprep.subr.mxu0 0.0
    %876 = vmatpush1.xpose.msra.mxu0 0.0
    %877 = vmatprep.subr.mxu0 0.0
    %878 = vmatpush1.xpose.msra.mxu0 0.0
    %879 = vmatprep.subr.mxu0 0.0
    %880 = vmatpush1.xpose.msra.mxu0 0.0
    %881 = vmatprep.subr.mxu0 0.0
    %882 = vmatpush1.xpose.msra.mxu0 0.0
    %883 = vmatprep.subr.mxu0 0.0
    %884 = vmatpush1.xpose.msra.mxu0 0.0
    %885 = vmatprep.subr.mxu0 0.0
    %886 = vmatpush1.xpose.msra.mxu0 0.0
    %887 = vmatprep.subr.mxu0 0.0
    %888 = vmatpush1.xpose.msra.mxu0 0.0
    %889 = vmatprep.subr.mxu0 0.0
    %890 = vmatpush1.xpose.msra.mxu0 0.0
    %891 = vmatprep.subr.mxu0 0.0
    %892 = vmatpush1.xpose.msra.mxu0 0.0
    %893 = vmatprep.subr.mxu0 0.0
    %894 = vmatpush1.xpose.msra.mxu0 0.0
    %895 = vmatprep.subr.mxu0 0.0
    %896 = vmatpush1.xpose.msra.mxu0 0.0
    %897 = vmatprep.subr.mxu0 0.0
    %898 = vmatpush1.xpose.msra.mxu0 0.0
    %899 = vmatprep.subr.mxu0 0.0
    %900 = vmatpush1.xpose.msra.mxu0 0.0
    %901 = vmatprep.subr.mxu0 0.0
    %902 = vmatpush1.xpose.msra.mxu0 0.0
    %903 = vmatprep.subr.mxu0 0.0
    %904 = vmatpush1.xpose.msra.mxu0 0.0
    %905 = vmatprep.subr.mxu0 0.0
    %906 = vmatpush1.xpose.msra.mxu0 0.0
    %907 = vmatprep.subr.mxu0 0.0
    %908 = vmatpush1.xpose.msra.mxu0 0.0
    %909 = vmatprep.subr.mxu0 0.0
    %910 = vmatpush1.xpose.msra.mxu0 0.0
    %911 = vmatprep.subr.mxu0 0.0
    %912 = vmatpush1.xpose.msra.mxu0 0.0
    %913 = vmatprep.subr.mxu0 0.0
    %914 = vmatpush1.xpose.msra.mxu0 0.0
    %915 = vmatprep.subr.mxu0 0.0
    %916 = vmatpush1.xpose.msra.mxu0 0.0
    %917 = vmatprep.subr.mxu0 0.0
    %918 = vmatpush1.xpose.msra.mxu0 0.0
    %919 = vmatprep.subr.mxu0 0.0
    %920 = vmatpush1.xpose.msra.mxu0 0.0
    %921 = vmatprep.subr.mxu0 0.0
    %922 = vmatpush1.xpose.msra.mxu0 0.0
    %923 = vmatprep.mubr.f32.mxu0 0.0
    %924 = vmatmul.mubr.f32.gmra.mrb[0].mxu0 %v855
    %v925 = vpop.f32.mrb[0].mxu0
    %v926 = vadd.f32 0.0, %v925
    %v927 = vpop.f32.mrb[0].mxu0
    %928 = vdwg.mxu0
    %v929 = vld [vmem:[%s3] sm:$0xff]
    %v930 = vld [vmem:[%s3 + $0x8] sm:$0xff]
    %vm931 = vcmp.eq.s32.totalorder %v929, 0
    %vm932 = vcmp.eq.s32.totalorder %v930, 0
    %v933 = vsel %vm931, -1e+19, %v408
    %v934 = vsel %vm932, -1e+19, %v482
    %v935 = vsel %vm931, -1e+19, %v556
    %v936 = vsel %vm932, -1e+19, %v630
    %v937 = vsel %vm931, -1e+19, %v704
    %v938 = vsel %vm932, -1e+19, %v778
    %v939 = vsel %vm931, -1e+19, %v852
    %v940 = vsel %vm932, -1e+19, %v926
    %v941 = vmul.f32 %v933, 0.35355338
    %v942 = vmul.f32 %v934, 0.35355338
    %v943 = vmul.f32 %v935, 0.35355338
    %v944 = vmul.f32 %v936, 0.35355338
    %v945 = vmul.f32 %v937, 0.35355338
    %v946 = vmul.f32 %v938, 0.35355338
    %v947 = vmul.f32 %v939, 0.35355338
    %v948 = vmul.f32 %v940, 0.35355338
    %v949 = vsel %vm336, %v941, -inf
    %950 = vmax.xlane.f32.xlu0 %v949
    %v951 = vpop.xlane.xlu0 %950
    %v952 = vsel %vm336, %v942, -inf
    %953 = vmax.xlane.f32.xlu0 %v952
    %v954 = vpop.xlane.xlu0 %953
    %v955 = vsel %vm336, %v943, -inf
    %956 = vmax.xlane.f32.xlu0 %v955
    %v957 = vpop.xlane.xlu0 %956
    %v958 = vsel %vm336, %v944, -inf
    %959 = vmax.xlane.f32.xlu0 %v958
    %v960 = vpop.xlane.xlu0 %959
    %v961 = vsel %vm336, %v945, -inf
    %962 = vmax.xlane.f32.xlu0 %v961
    %v963 = vpop.xlane.xlu0 %962
    %v964 = vsel %vm336, %v946, -inf
    %965 = vmax.xlane.f32.xlu0 %v964
    %v966 = vpop.xlane.xlu0 %965
    %v967 = vsel %vm336, %v947, -inf
    %968 = vmax.xlane.f32.xlu0 %v967
    %v969 = vpop.xlane.xlu0 %968
    %v970 = vsel %vm336, %v948, -inf
    %971 = vmax.xlane.f32.xlu0 %v970
    %v972 = vpop.xlane.xlu0 %971
    %v973 = vsub.f32 %v941, %v951
    %v974 = vsub.f32 %v942, %v954
    %v975 = vsub.f32 %v943, %v957
    %v976 = vsub.f32 %v944, %v960
    %v977 = vsub.f32 %v945, %v963
    %v978 = vsub.f32 %v946, %v966
    %v979 = vsub.f32 %v947, %v969
    %v980 = vsub.f32 %v948, %v972
    %v981 = vmul.f32 %v973, 1.442695
    %v982 = vpow.pop %v981
    %v983 = vmul.f32 %v974, 1.442695
    %v984 = vpow.pop %v983
    %v985 = vmul.f32 %v975, 1.442695
    %v986 = vpow.pop %v985
    %v987 = vmul.f32 %v976, 1.442695
    %v988 = vpow.pop %v987
    %v989 = vmul.f32 %v977, 1.442695
    %v990 = vpow.pop %v989
    %v991 = vmul.f32 %v978, 1.442695
    %v992 = vpow.pop %v991
    %v993 = vmul.f32 %v979, 1.442695
    %v994 = vpow.pop %v993
    %v995 = vmul.f32 %v980, 1.442695
    %v996 = vpow.pop %v995
    %v997 = vsel %vm336, %v982, 0.0
    %998 = vadd.xlane.f32.xlu0 %v997
    %v999 = vpop.xlane.xlu0 %998
    %v1000 = vsel %vm336, %v984, 0.0
    %1001 = vadd.xlane.f32.xlu0 %v1000
    %v1002 = vpop.xlane.xlu0 %1001
    %v1003 = vsel %vm336, %v986, 0.0
    %1004 = vadd.xlane.f32.xlu0 %v1003
    %v1005 = vpop.xlane.xlu0 %1004
    %v1006 = vsel %vm336, %v988, 0.0
    %1007 = vadd.xlane.f32.xlu0 %v1006
    %v1008 = vpop.xlane.xlu0 %1007
    %v1009 = vsel %vm336, %v990, 0.0
    %1010 = vadd.xlane.f32.xlu0 %v1009
    %v1011 = vpop.xlane.xlu0 %1010
    %v1012 = vsel %vm336, %v992, 0.0
    %1013 = vadd.xlane.f32.xlu0 %v1012
    %v1014 = vpop.xlane.xlu0 %1013
    %v1015 = vsel %vm336, %v994, 0.0
    %1016 = vadd.xlane.f32.xlu0 %v1015
    %v1017 = vpop.xlane.xlu0 %1016
    %v1018 = vsel %vm336, %v996, 0.0
    %1019 = vadd.xlane.f32.xlu0 %v1018
    %v1020 = vpop.xlane.xlu0 %1019
    %v1021 = vrcp.pop %v999
    %v1022 = vrcp.pop %v1002
    %v1023 = vrcp.pop %v1005
    %v1024 = vrcp.pop %v1008
    %v1025 = vrcp.pop %v1011
    %v1026 = vrcp.pop %v1014
    %v1027 = vrcp.pop %v1017
    %v1028 = vrcp.pop %v1020
    %v1029 = vmul.f32 %v999, %v1021
    %v1030 = vmul.f32 %v1002, %v1022
    %v1031 = vmul.f32 %v1005, %v1023
    %v1032 = vmul.f32 %v1008, %v1024
    %v1033 = vmul.f32 %v1011, %v1025
    %v1034 = vmul.f32 %v1014, %v1026
    %v1035 = vmul.f32 %v1017, %v1027
    %v1036 = vmul.f32 %v1020, %v1028
    %v1037 = vsub.f32 2.0, %v1029
    %v1038 = vsub.f32 2.0, %v1030
    %v1039 = vsub.f32 2.0, %v1031
    %v1040 = vsub.f32 2.0, %v1032
    %v1041 = vsub.f32 2.0, %v1033
    %v1042 = vsub.f32 2.0, %v1034
    %v1043 = vsub.f32 2.0, %v1035
    %v1044 = vsub.f32 2.0, %v1036
    %v1045 = vmul.f32 %v1021, %v1037
    %v1046 = vmul.f32 %v1022, %v1038
    %v1047 = vmul.f32 %v1023, %v1039
    %v1048 = vmul.f32 %v1024, %v1040
    %v1049 = vmul.f32 %v1025, %v1041
    %v1050 = vmul.f32 %v1026, %v1042
    %v1051 = vmul.f32 %v1027, %v1043
    %v1052 = vmul.f32 %v1028, %v1044
    %v1053 = vmul.f32 %v982, %v1045
    %v1054 = vmul.f32 %v984, %v1046
    %v1055 = vmul.f32 %v986, %v1047
    %v1056 = vmul.f32 %v988, %v1048
    %v1057 = vmul.f32 %v990, %v1049
    %v1058 = vmul.f32 %v992, %v1050
    %v1059 = vmul.f32 %v994, %v1051
    %v1060 = vmul.f32 %v996, %v1052
    %v1062 = vsel %vm336, %v1053, 0
    %1064 = vmatprep.subr.mxu0 0.0
    %1065 = vmatpush1.msra.mxu0 %v280
    %1066 = vmatprep.subr.mxu0 0.0
    %1067 = vmatpush1.msra.mxu0 0.0
    %1068 = vmatprep.subr.mxu0 0.0
    %1069 = vmatpush1.msra.mxu0 0.0
    %1070 = vmatprep.subr.mxu0 0.0
    %1071 = vmatpush1.msra.mxu0 0.0
    %1072 = vmatprep.subr.mxu0 0.0
    %1073 = vmatpush1.msra.mxu0 0.0
    %1074 = vmatprep.subr.mxu0 0.0
    %1075 = vmatpush1.msra.mxu0 0.0
    %1076 = vmatprep.subr.mxu0 0.0
    %1077 = vmatpush1.msra.mxu0 0.0
    %1078 = vmatprep.subr.mxu0 0.0
    %1079 = vmatpush1.msra.mxu0 0.0
    %1080 = vmatprep.subr.mxu0 0.0
    %1081 = vmatpush1.msra.mxu0 0.0
    %1082 = vmatprep.subr.mxu0 0.0
    %1083 = vmatpush1.msra.mxu0 0.0
    %1084 = vmatprep.subr.mxu0 0.0
    %1085 = vmatpush1.msra.mxu0 0.0
    %1086 = vmatprep.subr.mxu0 0.0
    %1087 = vmatpush1.msra.mxu0 0.0
    %1088 = vmatprep.subr.mxu0 0.0
    %1089 = vmatpush1.msra.mxu0 0.0
    %1090 = vmatprep.subr.mxu0 0.0
    %1091 = vmatpush1.msra.mxu0 0.0
    %1092 = vmatprep.subr.mxu0 0.0
    %1093 = vmatpush1.msra.mxu0 0.0
    %1094 = vmatprep.subr.mxu0 0.0
    %1095 = vmatpush1.msra.mxu0 0.0
    %1096 = vmatprep.subr.mxu0 0.0
    %1097 = vmatpush1.msra.mxu0 0.0
    %1098 = vmatprep.subr.mxu0 0.0
    %1099 = vmatpush1.msra.mxu0 0.0
    %1100 = vmatprep.subr.mxu0 0.0
    %1101 = vmatpush1.msra.mxu0 0.0
    %1102 = vmatprep.subr.mxu0 0.0
    %1103 = vmatpush1.msra.mxu0 0.0
    %1104 = vmatprep.subr.mxu0 0.0
    %1105 = vmatpush1.msra.mxu0 0.0
    %1106 = vmatprep.subr.mxu0 0.0
    %1107 = vmatpush1.msra.mxu0 0.0
    %1108 = vmatprep.subr.mxu0 0.0
    %1109 = vmatpush1.msra.mxu0 0.0
    %1110 = vmatprep.subr.mxu0 0.0
    %1111 = vmatpush1.msra.mxu0 0.0
    %1112 = vmatprep.subr.mxu0 0.0
    %1113 = vmatpush1.msra.mxu0 0.0
    %1114 = vmatprep.subr.mxu0 0.0
    %1115 = vmatpush1.msra.mxu0 0.0
    %1116 = vmatprep.subr.mxu0 0.0
    %1117 = vmatpush1.msra.mxu0 0.0
    %1118 = vmatprep.subr.mxu0 0.0
    %1119 = vmatpush1.msra.mxu0 0.0
    %1120 = vmatprep.subr.mxu0 0.0
    %1121 = vmatpush1.msra.mxu0 0.0
    %1122 = vmatprep.subr.mxu0 0.0
    %1123 = vmatpush1.msra.mxu0 0.0
    %1124 = vmatprep.subr.mxu0 0.0
    %1125 = vmatpush1.msra.mxu0 0.0
    %1126 = vmatprep.subr.mxu0 0.0
    %1127 = vmatpush1.msra.mxu0 0.0
    %1128 = vmatprep.mubr.f32.mxu0 0.0
    %1129 = vmatmul.mubr.f32.gmra.mrb[0].mxu0 %v1062
    %v1130 = vpop.f32.mrb[0].mxu0
    %v1131 = vadd.f32 0.0, %v1130
    %v1132 = vpop.f32.mrb[0].mxu0
    %1133 = vdwg.mxu0
    %v1135 = vsel %vm336, %v1054, 0
    %1137 = vmatprep.subr.mxu0 0.0
    %1138 = vmatpush1.msra.mxu0 %v285
    %1139 = vmatprep.subr.mxu0 0.0
    %1140 = vmatpush1.msra.mxu0 0.0
    %1141 = vmatprep.subr.mxu0 0.0
    %1142 = vmatpush1.msra.mxu0 0.0
    %1143 = vmatprep.subr.mxu0 0.0
    %1144 = vmatpush1.msra.mxu0 0.0
    %1145 = vmatprep.subr.mxu0 0.0
    %1146 = vmatpush1.msra.mxu0 0.0
    %1147 = vmatprep.subr.mxu0 0.0
    %1148 = vmatpush1.msra.mxu0 0.0
    %1149 = vmatprep.subr.mxu0 0.0
    %1150 = vmatpush1.msra.mxu0 0.0
    %1151 = vmatprep.subr.mxu0 0.0
    %1152 = vmatpush1.msra.mxu0 0.0
    %1153 = vmatprep.subr.mxu0 0.0
    %1154 = vmatpush1.msra.mxu0 0.0
    %1155 = vmatprep.subr.mxu0 0.0
    %1156 = vmatpush1.msra.mxu0 0.0
    %1157 = vmatprep.subr.mxu0 0.0
    %1158 = vmatpush1.msra.mxu0 0.0
    %1159 = vmatprep.subr.mxu0 0.0
    %1160 = vmatpush1.msra.mxu0 0.0
    %1161 = vmatprep.subr.mxu0 0.0
    %1162 = vmatpush1.msra.mxu0 0.0
    %1163 = vmatprep.subr.mxu0 0.0
    %1164 = vmatpush1.msra.mxu0 0.0
    %1165 = vmatprep.subr.mxu0 0.0
    %1166 = vmatpush1.msra.mxu0 0.0
    %1167 = vmatprep.subr.mxu0 0.0
    %1168 = vmatpush1.msra.mxu0 0.0
    %1169 = vmatprep.subr.mxu0 0.0
    %1170 = vmatpush1.msra.mxu0 0.0
    %1171 = vmatprep.subr.mxu0 0.0
    %1172 = vmatpush1.msra.mxu0 0.0
    %1173 = vmatprep.subr.mxu0 0.0
    %1174 = vmatpush1.msra.mxu0 0.0
    %1175 = vmatprep.subr.mxu0 0.0
    %1176 = vmatpush1.msra.mxu0 0.0
    %1177 = vmatprep.subr.mxu0 0.0
    %1178 = vmatpush1.msra.mxu0 0.0
    %1179 = vmatprep.subr.mxu0 0.0
    %1180 = vmatpush1.msra.mxu0 0.0
    %1181 = vmatprep.subr.mxu0 0.0
    %1182 = vmatpush1.msra.mxu0 0.0
    %1183 = vmatprep.subr.mxu0 0.0
    %1184 = vmatpush1.msra.mxu0 0.0
    %1185 = vmatprep.subr.mxu0 0.0
    %1186 = vmatpush1.msra.mxu0 0.0
    %1187 = vmatprep.subr.mxu0 0.0
    %1188 = vmatpush1.msra.mxu0 0.0
    %1189 = vmatprep.subr.mxu0 0.0
    %1190 = vmatpush1.msra.mxu0 0.0
    %1191 = vmatprep.subr.mxu0 0.0
    %1192 = vmatpush1.msra.mxu0 0.0
    %1193 = vmatprep.subr.mxu0 0.0
    %1194 = vmatpush1.msra.mxu0 0.0
    %1195 = vmatprep.subr.mxu0 0.0
    %1196 = vmatpush1.msra.mxu0 0.0
    %1197 = vmatprep.subr.mxu0 0.0
    %1198 = vmatpush1.msra.mxu0 0.0
    %1199 = vmatprep.subr.mxu0 0.0
    %1200 = vmatpush1.msra.mxu0 0.0
    %1201 = vmatprep.mubr.f32.mxu0 0.0
    %1202 = vmatmul.mubr.f32.gmra.mrb[0].mxu0 %v1135
    %v1203 = vpop.f32.mrb[0].mxu0
    %v1204 = vadd.f32 0.0, %v1203
    %v1205 = vpop.f32.mrb[0].mxu0
    %1206 = vdwg.mxu0
    %v1208 = vsel %vm336, %v1055, 0
    %1210 = vmatprep.subr.mxu0 0.0
    %1211 = vmatpush1.msra.mxu0 %v319
    %1212 = vmatprep.subr.mxu0 0.0
    %1213 = vmatpush1.msra.mxu0 0.0
    %1214 = vmatprep.subr.mxu0 0.0
    %1215 = vmatpush1.msra.mxu0 0.0
    %1216 = vmatprep.subr.mxu0 0.0
    %1217 = vmatpush1.msra.mxu0 0.0
    %1218 = vmatprep.subr.mxu0 0.0
    %1219 = vmatpush1.msra.mxu0 0.0
    %1220 = vmatprep.subr.mxu0 0.0
    %1221 = vmatpush1.msra.mxu0 0.0
    %1222 = vmatprep.subr.mxu0 0.0
    %1223 = vmatpush1.msra.mxu0 0.0
    %1224 = vmatprep.subr.mxu0 0.0
    %1225 = vmatpush1.msra.mxu0 0.0
    %1226 = vmatprep.subr.mxu0 0.0
    %1227 = vmatpush1.msra.mxu0 0.0
    %1228 = vmatprep.subr.mxu0 0.0
    %1229 = vmatpush1.msra.mxu0 0.0
    %1230 = vmatprep.subr.mxu0 0.0
    %1231 = vmatpush1.msra.mxu0 0.0
    %1232 = vmatprep.subr.mxu0 0.0
    %1233 = vmatpush1.msra.mxu0 0.0
    %1234 = vmatprep.subr.mxu0 0.0
    %1235 = vmatpush1.msra.mxu0 0.0
    %1236 = vmatprep.subr.mxu0 0.0
    %1237 = vmatpush1.msra.mxu0 0.0
    %1238 = vmatprep.subr.mxu0 0.0
    %1239 = vmatpush1.msra.mxu0 0.0
    %1240 = vmatprep.subr.mxu0 0.0
    %1241 = vmatpush1.msra.mxu0 0.0
    %1242 = vmatprep.subr.mxu0 0.0
    %1243 = vmatpush1.msra.mxu0 0.0
    %1244 = vmatprep.subr.mxu0 0.0
    %1245 = vmatpush1.msra.mxu0 0.0
    %1246 = vmatprep.subr.mxu0 0.0
    %1247 = vmatpush1.msra.mxu0 0.0
    %1248 = vmatprep.subr.mxu0 0.0
    %1249 = vmatpush1.msra.mxu0 0.0
    %1250 = vmatprep.subr.mxu0 0.0
    %1251 = vmatpush1.msra.mxu0 0.0
    %1252 = vmatprep.subr.mxu0 0.0
    %1253 = vmatpush1.msra.mxu0 0.0
    %1254 = vmatprep.subr.mxu0 0.0
    %1255 = vmatpush1.msra.mxu0 0.0
    %1256 = vmatprep.subr.mxu0 0.0
    %1257 = vmatpush1.msra.mxu0 0.0
    %1258 = vmatprep.subr.mxu0 0.0
    %1259 = vmatpush1.msra.mxu0 0.0
    %1260 = vmatprep.subr.mxu0 0.0
    %1261 = vmatpush1.msra.mxu0 0.0
    %1262 = vmatprep.subr.mxu0 0.0
    %1263 = vmatpush1.msra.mxu0 0.0
    %1264 = vmatprep.subr.mxu0 0.0
    %1265 = vmatpush1.msra.mxu0 0.0
    %1266 = vmatprep.subr.mxu0 0.0
    %1267 = vmatpush1.msra.mxu0 0.0
    %1268 = vmatprep.subr.mxu0 0.0
    %1269 = vmatpush1.msra.mxu0 0.0
    %1270 = vmatprep.subr.mxu0 0.0
    %1271 = vmatpush1.msra.mxu0 0.0
    %1272 = vmatprep.subr.mxu0 0.0
    %1273 = vmatpush1.msra.mxu0 0.0
    %1274 = vmatprep.mubr.f32.mxu0 0.0
    %1275 = vmatmul.mubr.f32.gmra.mrb[0].mxu0 %v1208
    %v1276 = vpop.f32.mrb[0].mxu0
    %v1277 = vadd.f32 0.0, %v1276
    %v1278 = vpop.f32.mrb[0].mxu0
    %1279 = vdwg.mxu0
    %v1281 = vsel %vm336, %v1056, 0
    %1283 = vmatprep.subr.mxu0 0.0
    %1284 = vmatpush1.msra.mxu0 %v321
    %1285 = vmatprep.subr.mxu0 0.0
    %1286 = vmatpush1.msra.mxu0 0.0
    %1287 = vmatprep.subr.mxu0 0.0
    %1288 = vmatpush1.msra.mxu0 0.0
    %1289 = vmatprep.subr.mxu0 0.0
    %1290 = vmatpush1.msra.mxu0 0.0
    %1291 = vmatprep.subr.mxu0 0.0
    %1292 = vmatpush1.msra.mxu0 0.0
    %1293 = vmatprep.subr.mxu0 0.0
    %1294 = vmatpush1.msra.mxu0 0.0
    %1295 = vmatprep.subr.mxu0 0.0
    %1296 = vmatpush1.msra.mxu0 0.0
    %1297 = vmatprep.subr.mxu0 0.0
    %1298 = vmatpush1.msra.mxu0 0.0
    %1299 = vmatprep.subr.mxu0 0.0
    %1300 = vmatpush1.msra.mxu0 0.0
    %1301 = vmatprep.subr.mxu0 0.0
    %1302 = vmatpush1.msra.mxu0 0.0
    %1303 = vmatprep.subr.mxu0 0.0
    %1304 = vmatpush1.msra.mxu0 0.0
    %1305 = vmatprep.subr.mxu0 0.0
    %1306 = vmatpush1.msra.mxu0 0.0
    %1307 = vmatprep.subr.mxu0 0.0
    %1308 = vmatpush1.msra.mxu0 0.0
    %1309 = vmatprep.subr.mxu0 0.0
    %1310 = vmatpush1.msra.mxu0 0.0
    %1311 = vmatprep.subr.mxu0 0.0
    %1312 = vmatpush1.msra.mxu0 0.0
    %1313 = vmatprep.subr.mxu0 0.0
    %1314 = vmatpush1.msra.mxu0 0.0
    %1315 = vmatprep.subr.mxu0 0.0
    %1316 = vmatpush1.msra.mxu0 0.0
    %1317 = vmatprep.subr.mxu0 0.0
    %1318 = vmatpush1.msra.mxu0 0.0
    %1319 = vmatprep.subr.mxu0 0.0
    %1320 = vmatpush1.msra.mxu0 0.0
    %1321 = vmatprep.subr.mxu0 0.0
    %1322 = vmatpush1.msra.mxu0 0.0
    %1323 = vmatprep.subr.mxu0 0.0
    %1324 = vmatpush1.msra.mxu0 0.0
    %1325 = vmatprep.subr.mxu0 0.0
    %1326 = vmatpush1.msra.mxu0 0.0
    %1327 = vmatprep.subr.mxu0 0.0
    %1328 = vmatpush1.msra.mxu0 0.0
    %1329 = vmatprep.subr.mxu0 0.0
    %1330 = vmatpush1.msra.mxu0 0.0
    %1331 = vmatprep.subr.mxu0 0.0
    %1332 = vmatpush1.msra.mxu0 0.0
    %1333 = vmatprep.subr.mxu0 0.0
    %1334 = vmatpush1.msra.mxu0 0.0
    %1335 = vmatprep.subr.mxu0 0.0
    %1336 = vmatpush1.msra.mxu0 0.0
    %1337 = vmatprep.subr.mxu0 0.0
    %1338 = vmatpush1.msra.mxu0 0.0
    %1339 = vmatprep.subr.mxu0 0.0
    %1340 = vmatpush1.msra.mxu0 0.0
    %1341 = vmatprep.subr.mxu0 0.0
    %1342 = vmatpush1.msra.mxu0 0.0
    %1343 = vmatprep.subr.mxu0 0.0
    %1344 = vmatpush1.msra.mxu0 0.0
    %1345 = vmatprep.subr.mxu0 0.0
    %1346 = vmatpush1.msra.mxu0 0.0
    %1347 = vmatprep.mubr.f32.mxu0 0.0
    %1348 = vmatmul.mubr.f32.gmra.mrb[0].mxu0 %v1281
    %v1349 = vpop.f32.mrb[0].mxu0
    %v1350 = vadd.f32 0.0, %v1349
    %v1351 = vpop.f32.mrb[0].mxu0
    %1352 = vdwg.mxu0
    %v1354 = vsel %vm336, %v1057, 0
    %1356 = vmatprep.subr.mxu0 0.0
    %1357 = vmatpush1.msra.mxu0 %v325
    %1358 = vmatprep.subr.mxu0 0.0
    %1359 = vmatpush1.msra.mxu0 0.0
    %1360 = vmatprep.subr.mxu0 0.0
    %1361 = vmatpush1.msra.mxu0 0.0
    %1362 = vmatprep.subr.mxu0 0.0
    %1363 = vmatpush1.msra.mxu0 0.0
    %1364 = vmatprep.subr.mxu0 0.0
    %1365 = vmatpush1.msra.mxu0 0.0
    %1366 = vmatprep.subr.mxu0 0.0
    %1367 = vmatpush1.msra.mxu0 0.0
    %1368 = vmatprep.subr.mxu0 0.0
    %1369 = vmatpush1.msra.mxu0 0.0
    %1370 = vmatprep.subr.mxu0 0.0
    %1371 = vmatpush1.msra.mxu0 0.0
    %1372 = vmatprep.subr.mxu0 0.0
    %1373 = vmatpush1.msra.mxu0 0.0
    %1374 = vmatprep.subr.mxu0 0.0
    %1375 = vmatpush1.msra.mxu0 0.0
    %1376 = vmatprep.subr.mxu0 0.0
    %1377 = vmatpush1.msra.mxu0 0.0
    %1378 = vmatprep.subr.mxu0 0.0
    %1379 = vmatpush1.msra.mxu0 0.0
    %1380 = vmatprep.subr.mxu0 0.0
    %1381 = vmatpush1.msra.mxu0 0.0
    %1382 = vmatprep.subr.mxu0 0.0
    %1383 = vmatpush1.msra.mxu0 0.0
    %1384 = vmatprep.subr.mxu0 0.0
    %1385 = vmatpush1.msra.mxu0 0.0
    %1386 = vmatprep.subr.mxu0 0.0
    %1387 = vmatpush1.msra.mxu0 0.0
    %1388 = vmatprep.subr.mxu0 0.0
    %1389 = vmatpush1.msra.mxu0 0.0
    %1390 = vmatprep.subr.mxu0 0.0
    %1391 = vmatpush1.msra.mxu0 0.0
    %1392 = vmatprep.subr.mxu0 0.0
    %1393 = vmatpush1.msra.mxu0 0.0
    %1394 = vmatprep.subr.mxu0 0.0
    %1395 = vmatpush1.msra.mxu0 0.0
    %1396 = vmatprep.subr.mxu0 0.0
    %1397 = vmatpush1.msra.mxu0 0.0
    %1398 = vmatprep.subr.mxu0 0.0
    %1399 = vmatpush1.msra.mxu0 0.0
    %1400 = vmatprep.subr.mxu0 0.0
    %1401 = vmatpush1.msra.mxu0 0.0
    %1402 = vmatprep.subr.mxu0 0.0
    %1403 = vmatpush1.msra.mxu0 0.0
    %1404 = vmatprep.subr.mxu0 0.0
    %1405 = vmatpush1.msra.mxu0 0.0
    %1406 = vmatprep.subr.mxu0 0.0
    %1407 = vmatpush1.msra.mxu0 0.0
    %1408 = vmatprep.subr.mxu0 0.0
    %1409 = vmatpush1.msra.mxu0 0.0
    %1410 = vmatprep.subr.mxu0 0.0
    %1411 = vmatpush1.msra.mxu0 0.0
    %1412 = vmatprep.subr.mxu0 0.0
    %1413 = vmatpush1.msra.mxu0 0.0
    %1414 = vmatprep.subr.mxu0 0.0
    %1415 = vmatpush1.msra.mxu0 0.0
    %1416 = vmatprep.subr.mxu0 0.0
    %1417 = vmatpush1.msra.mxu0 0.0
    %1418 = vmatprep.subr.mxu0 0.0
    %1419 = vmatpush1.msra.mxu0 0.0
    %1420 = vmatprep.mubr.f32.mxu0 0.0
    %1421 = vmatmul.mubr.f32.gmra.mrb[0].mxu0 %v1354
    %v1422 = vpop.f32.mrb[0].mxu0
    %v1423 = vadd.f32 0.0, %v1422
    %v1424 = vpop.f32.mrb[0].mxu0
    %1425 = vdwg.mxu0
    %v1427 = vsel %vm336, %v1058, 0
    %1429 = vmatprep.subr.mxu0 0.0
    %1430 = vmatpush1.msra.mxu0 %v327
    %1431 = vmatprep.subr.mxu0 0.0
    %1432 = vmatpush1.msra.mxu0 0.0
    %1433 = vmatprep.subr.mxu0 0.0
    %1434 = vmatpush1.msra.mxu0 0.0
    %1435 = vmatprep.subr.mxu0 0.0
    %1436 = vmatpush1.msra.mxu0 0.0
    %1437 = vmatprep.subr.mxu0 0.0
    %1438 = vmatpush1.msra.mxu0 0.0
    %1439 = vmatprep.subr.mxu0 0.0
    %1440 = vmatpush1.msra.mxu0 0.0
    %1441 = vmatprep.subr.mxu0 0.0
    %1442 = vmatpush1.msra.mxu0 0.0
    %1443 = vmatprep.subr.mxu0 0.0
    %1444 = vmatpush1.msra.mxu0 0.0
    %1445 = vmatprep.subr.mxu0 0.0
    %1446 = vmatpush1.msra.mxu0 0.0
    %1447 = vmatprep.subr.mxu0 0.0
    %1448 = vmatpush1.msra.mxu0 0.0
    %1449 = vmatprep.subr.mxu0 0.0
    %1450 = vmatpush1.msra.mxu0 0.0
    %1451 = vmatprep.subr.mxu0 0.0
    %1452 = vmatpush1.msra.mxu0 0.0
    %1453 = vmatprep.subr.mxu0 0.0
    %1454 = vmatpush1.msra.mxu0 0.0
    %1455 = vmatprep.subr.mxu0 0.0
    %1456 = vmatpush1.msra.mxu0 0.0
    %1457 = vmatprep.subr.mxu0 0.0
    %1458 = vmatpush1.msra.mxu0 0.0
    %1459 = vmatprep.subr.mxu0 0.0
    %1460 = vmatpush1.msra.mxu0 0.0
    %1461 = vmatprep.subr.mxu0 0.0
    %1462 = vmatpush1.msra.mxu0 0.0
    %1463 = vmatprep.subr.mxu0 0.0
    %1464 = vmatpush1.msra.mxu0 0.0
    %1465 = vmatprep.subr.mxu0 0.0
    %1466 = vmatpush1.msra.mxu0 0.0
    %1467 = vmatprep.subr.mxu0 0.0
    %1468 = vmatpush1.msra.mxu0 0.0
    %1469 = vmatprep.subr.mxu0 0.0
    %1470 = vmatpush1.msra.mxu0 0.0
    %1471 = vmatprep.subr.mxu0 0.0
    %1472 = vmatpush1.msra.mxu0 0.0
    %1473 = vmatprep.subr.mxu0 0.0
    %1474 = vmatpush1.msra.mxu0 0.0
    %1475 = vmatprep.subr.mxu0 0.0
    %1476 = vmatpush1.msra.mxu0 0.0
    %1477 = vmatprep.subr.mxu0 0.0
    %1478 = vmatpush1.msra.mxu0 0.0
    %1479 = vmatprep.subr.mxu0 0.0
    %1480 = vmatpush1.msra.mxu0 0.0
    %1481 = vmatprep.subr.mxu0 0.0
    %1482 = vmatpush1.msra.mxu0 0.0
    %1483 = vmatprep.subr.mxu0 0.0
    %1484 = vmatpush1.msra.mxu0 0.0
    %1485 = vmatprep.subr.mxu0 0.0
    %1486 = vmatpush1.msra.mxu0 0.0
    %1487 = vmatprep.subr.mxu0 0.0
    %1488 = vmatpush1.msra.mxu0 0.0
    %1489 = vmatprep.subr.mxu0 0.0
    %1490 = vmatpush1.msra.mxu0 0.0
    %1491 = vmatprep.subr.mxu0 0.0
    %1492 = vmatpush1.msra.mxu0 0.0
    %1493 = vmatprep.mubr.f32.mxu0 0.0
    %1494 = vmatmul.mubr.f32.gmra.mrb[0].mxu0 %v1427
    %v1495 = vpop.f32.mrb[0].mxu0
    %v1496 = vadd.f32 0.0, %v1495
    %v1497 = vpop.f32.mrb[0].mxu0
    %1498 = vdwg.mxu0
    %v1500 = vsel %vm336, %v1059, 0
    %1502 = vmatprep.subr.mxu0 0.0
    %1503 = vmatpush1.msra.mxu0 %v331
    %1504 = vmatprep.subr.mxu0 0.0
    %1505 = vmatpush1.msra.mxu0 0.0
    %1506 = vmatprep.subr.mxu0 0.0
    %1507 = vmatpush1.msra.mxu0 0.0
    %1508 = vmatprep.subr.mxu0 0.0
    %1509 = vmatpush1.msra.mxu0 0.0
    %1510 = vmatprep.subr.mxu0 0.0
    %1511 = vmatpush1.msra.mxu0 0.0
    %1512 = vmatprep.subr.mxu0 0.0
    %1513 = vmatpush1.msra.mxu0 0.0
    %1514 = vmatprep.subr.mxu0 0.0
    %1515 = vmatpush1.msra.mxu0 0.0
    %1516 = vmatprep.subr.mxu0 0.0
    %1517 = vmatpush1.msra.mxu0 0.0
    %1518 = vmatprep.subr.mxu0 0.0
    %1519 = vmatpush1.msra.mxu0 0.0
    %1520 = vmatprep.subr.mxu0 0.0
    %1521 = vmatpush1.msra.mxu0 0.0
    %1522 = vmatprep.subr.mxu0 0.0
    %1523 = vmatpush1.msra.mxu0 0.0
    %1524 = vmatprep.subr.mxu0 0.0
    %1525 = vmatpush1.msra.mxu0 0.0
    %1526 = vmatprep.subr.mxu0 0.0
    %1527 = vmatpush1.msra.mxu0 0.0
    %1528 = vmatprep.subr.mxu0 0.0
    %1529 = vmatpush1.msra.mxu0 0.0
    %1530 = vmatprep.subr.mxu0 0.0
    %1531 = vmatpush1.msra.mxu0 0.0
    %1532 = vmatprep.subr.mxu0 0.0
    %1533 = vmatpush1.msra.mxu0 0.0
    %1534 = vmatprep.subr.mxu0 0.0
    %1535 = vmatpush1.msra.mxu0 0.0
    %1536 = vmatprep.subr.mxu0 0.0
    %1537 = vmatpush1.msra.mxu0 0.0
    %1538 = vmatprep.subr.mxu0 0.0
    %1539 = vmatpush1.msra.mxu0 0.0
    %1540 = vmatprep.subr.mxu0 0.0
    %1541 = vmatpush1.msra.mxu0 0.0
    %1542 = vmatprep.subr.mxu0 0.0
    %1543 = vmatpush1.msra.mxu0 0.0
    %1544 = vmatprep.subr.mxu0 0.0
    %1545 = vmatpush1.msra.mxu0 0.0
    %1546 = vmatprep.subr.mxu0 0.0
    %1547 = vmatpush1.msra.mxu0 0.0
    %1548 = vmatprep.subr.mxu0 0.0
    %1549 = vmatpush1.msra.mxu0 0.0
    %1550 = vmatprep.subr.mxu0 0.0
    %1551 = vmatpush1.msra.mxu0 0.0
    %1552 = vmatprep.subr.mxu0 0.0
    %1553 = vmatpush1.msra.mxu0 0.0
    %1554 = vmatprep.subr.mxu0 0.0
    %1555 = vmatpush1.msra.mxu0 0.0
    %1556 = vmatprep.subr.mxu0 0.0
    %1557 = vmatpush1.msra.mxu0 0.0
    %1558 = vmatprep.subr.mxu0 0.0
    %1559 = vmatpush1.msra.mxu0 0.0
    %1560 = vmatprep.subr.mxu0 0.0
    %1561 = vmatpush1.msra.mxu0 0.0
    %1562 = vmatprep.subr.mxu0 0.0
    %1563 = vmatpush1.msra.mxu0 0.0
    %1564 = vmatprep.subr.mxu0 0.0
    %1565 = vmatpush1.msra.mxu0 0.0
    %1566 = vmatprep.mubr.f32.mxu0 0.0
    %1567 = vmatmul.mubr.f32.gmra.mrb[0].mxu0 %v1500
    %v1568 = vpop.f32.mrb[0].mxu0
    %v1569 = vadd.f32 0.0, %v1568
    %v1570 = vpop.f32.mrb[0].mxu0
    %1571 = vdwg.mxu0
    %v1573 = vsel %vm336, %v1060, 0
    %1575 = vmatprep.subr.mxu0 0.0
    %1576 = vmatpush1.msra.mxu0 %v333
    %1577 = vmatprep.subr.mxu0 0.0
    %1578 = vmatpush1.msra.mxu0 0.0
    %1579 = vmatprep.subr.mxu0 0.0
    %1580 = vmatpush1.msra.mxu0 0.0
    %1581 = vmatprep.subr.mxu0 0.0
    %1582 = vmatpush1.msra.mxu0 0.0
    %1583 = vmatprep.subr.mxu0 0.0
    %1584 = vmatpush1.msra.mxu0 0.0
    %1585 = vmatprep.subr.mxu0 0.0
    %1586 = vmatpush1.msra.mxu0 0.0
    %1587 = vmatprep.subr.mxu0 0.0
    %1588 = vmatpush1.msra.mxu0 0.0
    %1589 = vmatprep.subr.mxu0 0.0
    %1590 = vmatpush1.msra.mxu0 0.0
    %1591 = vmatprep.subr.mxu0 0.0
    %1592 = vmatpush1.msra.mxu0 0.0
    %1593 = vmatprep.subr.mxu0 0.0
    %1594 = vmatpush1.msra.mxu0 0.0
    %1595 = vmatprep.subr.mxu0 0.0
    %1596 = vmatpush1.msra.mxu0 0.0
    %1597 = vmatprep.subr.mxu0 0.0
    %1598 = vmatpush1.msra.mxu0 0.0
    %1599 = vmatprep.subr.mxu0 0.0
    %1600 = vmatpush1.msra.mxu0 0.0
    %1601 = vmatprep.subr.mxu0 0.0
    %1602 = vmatpush1.msra.mxu0 0.0
    %1603 = vmatprep.subr.mxu0 0.0
    %1604 = vmatpush1.msra.mxu0 0.0
    %1605 = vmatprep.subr.mxu0 0.0
    %1606 = vmatpush1.msra.mxu0 0.0
    %1607 = vmatprep.subr.mxu0 0.0
    %1608 = vmatpush1.msra.mxu0 0.0
    %1609 = vmatprep.subr.mxu0 0.0
    %1610 = vmatpush1.msra.mxu0 0.0
    %1611 = vmatprep.subr.mxu0 0.0
    %1612 = vmatpush1.msra.mxu0 0.0
    %1613 = vmatprep.subr.mxu0 0.0
    %1614 = vmatpush1.msra.mxu0 0.0
    %1615 = vmatprep.subr.mxu0 0.0
    %1616 = vmatpush1.msra.mxu0 0.0
    %1617 = vmatprep.subr.mxu0 0.0
    %1618 = vmatpush1.msra.mxu0 0.0
    %1619 = vmatprep.subr.mxu0 0.0
    %1620 = vmatpush1.msra.mxu0 0.0
    %1621 = vmatprep.subr.mxu0 0.0
    %1622 = vmatpush1.msra.mxu0 0.0
    %1623 = vmatprep.subr.mxu0 0.0
    %1624 = vmatpush1.msra.mxu0 0.0
    %1625 = vmatprep.subr.mxu0 0.0
    %1626 = vmatpush1.msra.mxu0 0.0
    %1627 = vmatprep.subr.mxu0 0.0
    %1628 = vmatpush1.msra.mxu0 0.0
    %1629 = vmatprep.subr.mxu0 0.0
    %1630 = vmatpush1.msra.mxu0 0.0
    %1631 = vmatprep.subr.mxu0 0.0
    %1632 = vmatpush1.msra.mxu0 0.0
    %1633 = vmatprep.subr.mxu0 0.0
    %1634 = vmatpush1.msra.mxu0 0.0
    %1635 = vmatprep.subr.mxu0 0.0
    %1636 = vmatpush1.msra.mxu0 0.0
    %1637 = vmatprep.subr.mxu0 0.0
    %1638 = vmatpush1.msra.mxu0 0.0
    %1639 = vmatprep.mubr.f32.mxu0 0.0
    %1640 = vmatmul.mubr.f32.gmra.mrb[0].mxu0 %v1573
    %v1641 = vpop.f32.mrb[0].mxu0
    %v1642 = vadd.f32 0.0, %v1641
    %v1643 = vpop.f32.mrb[0].mxu0
    %1644 = vdwg.mxu0
    %1647 = vrot.lane.b32.xlu0 %v1277, 8
    %v1648 = vpop.permute.xlu0 %1647
    %1649 = vrot.lane.b32.xlu0 %v1350, 8
    %v1650 = vpop.permute.xlu0 %1649
    %1655 = vrot.lane.b32.xlu0 %v1423, 16
    %v1656 = vpop.permute.xlu0 %1655
    %1657 = vrot.lane.b32.xlu0 %v1496, 16
    %v1658 = vpop.permute.xlu0 %1657
    %1663 = vrot.lane.b32.xlu0 %v1569, 24
    %v1664 = vpop.permute.xlu0 %1663
    %1665 = vrot.lane.b32.xlu0 %v1642, 24
    %v1666 = vpop.permute.xlu0 %1665
    %v1669 = vsel %vm336, %v1131, %v1648
    %v1670 = vsel %vm336, %v1204, %v1650
    %vm1671 = vcmask 130048
    %v1672 = vsel %vm1671, %v1669, %v1656
    %v1673 = vsel %vm1671, %v1670, %v1658
    %vm1674 = vcmask 195584
    %v1675 = vsel %vm1674, %v1672, %v1664
    %v1676 = vsel %vm1674, %v1673, %v1666
    %v1677 = vlaneseq
    %v1678 = vshrl.u32 %v1677, 7
    %v1679 = vsub.s32 0, %v1678
    %v1680 = vrot.slane %v37, %v1679
    %v1682 = vsel %vm44, %v1675, 0
    %v1685 = vsel %vm44, %v1676, 0
    %1687 = vmatprep.subr.mxu0 0.0
    %1688 = vmatpush1.msra.mxu0 %v33
    %1689 = vmatprep.subr.mxu0 0.0
    %1690 = vmatpush1.msra.mxu0 %v34
    %1691 = vmatprep.subr.mxu0 0.0
    %1692 = vmatpush1.msra.mxu0 %v35
    %1693 = vmatprep.subr.mxu0 0.0
    %1694 = vmatpush1.msra.mxu0 %v36
    %1695 = vmatprep.subr.mxu0 0.0
    %1696 = vmatpush1.msra.mxu0 0.0
    %1697 = vmatprep.subr.mxu0 0.0
    %1698 = vmatpush1.msra.mxu0 0.0
    %1699 = vmatprep.subr.mxu0 0.0
    %1700 = vmatpush1.msra.mxu0 0.0
    %1701 = vmatprep.subr.mxu0 0.0
    %1702 = vmatpush1.msra.mxu0 0.0
    %1703 = vmatprep.subr.mxu0 0.0
    %1704 = vmatpush1.msra.mxu0 0.0
    %1705 = vmatprep.subr.mxu0 0.0
    %1706 = vmatpush1.msra.mxu0 0.0
    %1707 = vmatprep.subr.mxu0 0.0
    %1708 = vmatpush1.msra.mxu0 0.0
    %1709 = vmatprep.subr.mxu0 0.0
    %1710 = vmatpush1.msra.mxu0 0.0
    %1711 = vmatprep.subr.mxu0 0.0
    %1712 = vmatpush1.msra.mxu0 0.0
    %1713 = vmatprep.subr.mxu0 0.0
    %1714 = vmatpush1.msra.mxu0 0.0
    %1715 = vmatprep.subr.mxu0 0.0
    %1716 = vmatpush1.msra.mxu0 0.0
    %1717 = vmatprep.subr.mxu0 0.0
    %1718 = vmatpush1.msra.mxu0 0.0
    %1719 = vmatprep.subr.mxu0 0.0
    %1720 = vmatpush1.msra.mxu0 0.0
    %1721 = vmatprep.subr.mxu0 0.0
    %1722 = vmatpush1.msra.mxu0 0.0
    %1723 = vmatprep.subr.mxu0 0.0
    %1724 = vmatpush1.msra.mxu0 0.0
    %1725 = vmatprep.subr.mxu0 0.0
    %1726 = vmatpush1.msra.mxu0 0.0
    %1727 = vmatprep.subr.mxu0 0.0
    %1728 = vmatpush1.msra.mxu0 0.0
    %1729 = vmatprep.subr.mxu0 0.0
    %1730 = vmatpush1.msra.mxu0 0.0
    %1731 = vmatprep.subr.mxu0 0.0
    %1732 = vmatpush1.msra.mxu0 0.0
    %1733 = vmatprep.subr.mxu0 0.0
    %1734 = vmatpush1.msra.mxu0 0.0
    %1735 = vmatprep.subr.mxu0 0.0
    %1736 = vmatpush1.msra.mxu0 0.0
    %1737 = vmatprep.subr.mxu0 0.0
    %1738 = vmatpush1.msra.mxu0 0.0
    %1739 = vmatprep.subr.mxu0 0.0
    %1740 = vmatpush1.msra.mxu0 0.0
    %1741 = vmatprep.subr.mxu0 0.0
    %1742 = vmatpush1.msra.mxu0 0.0
    %1743 = vmatprep.subr.mxu0 0.0
    %1744 = vmatpush1.msra.mxu0 0.0
    %1745 = vmatprep.subr.mxu0 0.0
    %1746 = vmatpush1.msra.mxu0 0.0
    %1747 = vmatprep.subr.mxu0 0.0
    %1748 = vmatpush1.msra.mxu0 0.0
    %1749 = vmatprep.subr.mxu0 0.0
    %1750 = vmatpush1.msra.mxu0 0.0
    %1751 = vmatprep.mubr.f32.mxu0 0.0
    %1752 = vmatmul.mubr.f32.gmra.mrb[0].mxu0 %v1682
    %v1753 = vpop.f32.mrb[0].mxu0
    %v1754 = vadd.f32 %v1680, %v1753
    %v1755 = vpop.f32.mrb[0].mxu0
    %1756 = vmatprep.mubr.f32.mxu0 0.0
    %1757 = vmatmul.mubr.f32.gmra.mrb[0].mxu0 %v1685
    %v1758 = vpop.f32.mrb[0].mxu0
    %v1759 = vadd.f32 %v1680, %v1758
    %v1760 = vpop.f32.mrb[0].mxu0
    %1761 = vdwg.mxu0
    %v1764 = vrot.slane %v1754, 1
    %v1765 = vrot.slane %v1759, 1
    %1766 = vrot.lane.b32.xlu0 %v1764, 32
    %v1767 = vpop.permute.xlu0 %1766
    %1768 = vrot.lane.b32.xlu0 %v1765, 32
    %v1769 = vpop.permute.xlu0 %1768
    %v1772 = vrot.slane %v1754, 2
    %v1773 = vrot.slane %v1759, 2
    %1774 = vrot.lane.b32.xlu0 %v1772, 64
    %v1775 = vpop.permute.xlu0 %1774
    %1776 = vrot.lane.b32.xlu0 %v1773, 64
    %v1777 = vpop.permute.xlu0 %1776
    %v1780 = vrot.slane %v1754, 3
    %v1781 = vrot.slane %v1759, 3
    %1782 = vrot.lane.b32.xlu0 %v1780, 96
    %v1783 = vpop.permute.xlu0 %1782
    %1784 = vrot.lane.b32.xlu0 %v1781, 96
    %v1785 = vpop.permute.xlu0 %1784
    %v1788 = vrot.slane %v1754, 4
    %v1789 = vrot.slane %v1759, 4
    %v1792 = vrot.slane %v1754, 5
    %v1793 = vrot.slane %v1759, 5
    %1794 = vrot.lane.b32.xlu0 %v1792, 32
    %v1795 = vpop.permute.xlu0 %1794
    %1796 = vrot.lane.b32.xlu0 %v1793, 32
    %v1797 = vpop.permute.xlu0 %1796
    %v1800 = vrot.slane %v1754, 6
    %v1801 = vrot.slane %v1759, 6
    %1802 = vrot.lane.b32.xlu0 %v1800, 64
    %v1803 = vpop.permute.xlu0 %1802
    %1804 = vrot.lane.b32.xlu0 %v1801, 64
    %v1805 = vpop.permute.xlu0 %1804
    %v1808 = vrot.slane %v1754, 7
    %v1809 = vrot.slane %v1759, 7
    %1810 = vrot.lane.b32.xlu0 %v1808, 96
    %v1811 = vpop.permute.xlu0 %1810
    %1812 = vrot.lane.b32.xlu0 %v1809, 96
    %v1813 = vpop.permute.xlu0 %1812
    %v1816 = vsel %vm44, %v1754, %v1767
    %v1817 = vsel %vm44, %v1759, %v1769
    %vm1818 = vcmask 523264
    %v1819 = vsel %vm1818, %v1816, %v1775
    %v1820 = vsel %vm1818, %v1817, %v1777
    %vm1821 = vcmask 785408
    %v1822 = vsel %vm1821, %v1819, %v1783
    %v1823 = vsel %vm1821, %v1820, %v1785
    %v1824 = vsel %vm44, %v1788, %v1795
    %v1825 = vsel %vm44, %v1789, %v1797
    %v1826 = vsel %vm1818, %v1824, %v1803
    %v1827 = vsel %vm1818, %v1825, %v1805
    %v1828 = vsel %vm1821, %v1826, %v1811
    %v1829 = vsel %vm1821, %v1827, %v1813
    %v1834 = vcombine.low %v1822, %v1828
    %v1836 = vunpack.c.l.s4 1966171168
    %v1837 = vunpack.c.0.s8 %v1836
    %v1838 = vlaneseq
    %v1839 = vshrl.u32 %v1838, 7
    %v1840 = vsub.s32 %v1837, %v1839
    %v1841 = vrot.slane %v1834, %v1840
    %v1843 = vunpack.c.l.s4 1966171168
    %v1844 = vunpack.c.0.s8 %v1843
    %v1845 = vlaneseq
    %v1846 = vshrl.u32 %v1845, 7
    %v1847 = vsub.s32 %v1844, %v1846
    %v1848 = vrot.slane %v1841, %v1847
    %v1849 = vcombine.low %v1823, %v1829
    %v1851 = vunpack.c.l.s4 1966171168
    %v1852 = vunpack.c.0.s8 %v1851
    %v1853 = vlaneseq
    %v1854 = vshrl.u32 %v1853, 7
    %v1855 = vsub.s32 %v1852, %v1854
    %v1856 = vrot.slane %v1849, %v1855
    %v1858 = vunpack.c.l.s4 1966171168
    %v1859 = vunpack.c.0.s8 %v1858
    %v1860 = vlaneseq
    %v1861 = vshrl.u32 %v1860, 7
    %v1862 = vsub.s32 %v1859, %v1861
    %v1863 = vrot.slane %v1856, %v1862
    %v1866 = vlaneseq
    %vm1867 = vcmp.ge.s32.totalorder %v1866, 0
    %vm1868 = vcmp.lt.s32.totalorder %v1866, 256
    %vm1869 = vmand %vm1867, %vm1868
    %1870 = vst.msk [vmem:[#allocation2] sm:$0x3] %vm1869, %v1848
    %1871 = vst.msk [vmem:[#allocation2 + $0x2] sm:$0x3] %vm1869, %v1863
    // Predicated region
    $region22: #{tpu_custom_call.1} parent=1 // pred_check
      _
    $region23: #{tpu_custom_call.1} parent=1 // pred_check_branch
      %1873 = sbr.rel (0) target = $region25
    $region24: #{tpu_custom_call.1} parent=1 // pred_region
      %s1875 = ssub.s32 64, 64
      %1876 = vsyncadd [#allocation3], %s1875
      %s1877 = sshll.u32 [#allocation2], 4
      %s1878 = int_to_ptr.vmem [resolvable:$true] %s1877
      %1883 = dma.vmem_to_hbm [thread:$0]  %s1878, 64, %s5, [#allocation3], 32, 32, 2
    $region25: #{tpu_custom_call.1} parent=1 // pred_fallthru
      _
    // Predicated region
    $region26: #{tpu_custom_call.1} parent=1 // pred_check
      _
    $region27: #{tpu_custom_call.1} parent=1 // pred_check_branch
      %1885 = sbr.rel (0) target = $region29
    $region28: #{tpu_custom_call.1} parent=1 // pred_region
      %1886 = dma.done [#allocation3], 64
    $region29: #{tpu_custom_call.1} parent=1 // pred_fallthru
      _
    %1887 = vsyncpa [#allocation3], 1

</llo_original>
